<compile_context>
chip_gen: v6e
topology: v6e:2x2x1
jax: 0.10.0
libtpu: 0.0.40
codegen_flags: <defaults>
</compile_context>

<pallas_src>
import functools

import jax
import jax.numpy as jnp
import numpy as np
from jax.experimental import pallas as pl
from jax.experimental.pallas import tpu as pltpu


def _round_up(x, m):
    return ((x + m - 1) // m) * m


def rnn_lstm_kernel(x_ref, wcomb_ref, bcomb_ref, whh_ref, wout_ref, bout_ref,
                    o_ref, gx_ref, *, win_num, hidden, tile_b, unroll):
    """One batch tile of the full forward pass.

    x_ref    : (win_num, tile_b, t_feat)   bf16, time-major batch tile
    wcomb_ref: (t_feat, 4*hidden)          bf16, w_emb folded into fused W_ih
    bcomb_ref: (1, 4*hidden)               f32,  b_emb@W_ih + (b_ih + b_hh)
    whh_ref  : (hidden, 4*hidden)          bf16, fused recurrent weights
    wout_ref : (1, hidden)                 bf16, output head (row vector)
    bout_ref : (1, 1)                      f32,  SMEM scalar
    o_ref    : (1, tile_b)                 f32,  lane-dense output row
    gx_ref   : (win_num, tile_b, 4*hidden) f32 VMEM scratch
    """
    four_h = 4 * hidden
    t_feat = x_ref.shape[-1]

    # Hoisted input projection for every timestep of this tile: one lane-dense
    # bf16 MXU matmul with f32 accumulation; bias folded in once, outside the
    # recurrence.  Stored time-major so per-step reads are sublane-aligned.
    x2d = x_ref[...].reshape(win_num * tile_b, t_feat)
    gx = jnp.dot(x2d, wcomb_ref[...], preferred_element_type=jnp.float32)
    gx_ref[...] = gx.reshape(win_num, tile_b, four_h) + bcomb_ref[...]

    whh = whh_ref[...]
    # Lane mask selecting the 'g' gate block (tanh); other gates use sigmoid.
    lane = jax.lax.broadcasted_iota(jnp.int32, (1, four_h), 1)
    g_mask = (lane >= 2 * hidden) & (lane < 3 * hidden)

    def step(t, carry):
        h, c = carry
        # Only this (tile_b, hidden) @ (hidden, 4*hidden) matmul is serial.
        gates = gx_ref[t] + jnp.dot(h.astype(whh.dtype), whh,
                                    preferred_element_type=jnp.float32)
        # Activate all four gates in one pass (2 full-width EUP ops + select),
        # then slice the already-activated tile.
        act = jnp.where(g_mask, jnp.tanh(gates), jax.nn.sigmoid(gates))
        i_g = act[:, 0 * hidden:1 * hidden]
        f_g = act[:, 1 * hidden:2 * hidden]
        g_g = act[:, 2 * hidden:3 * hidden]
        o_g = act[:, 3 * hidden:4 * hidden]
        c = f_g * c + i_g * g_g
        h = o_g * jnp.tanh(c)
        return h, c

    h0 = jnp.zeros((tile_b, hidden), jnp.float32)
    c0 = jnp.zeros((tile_b, hidden), jnp.float32)
    h, _ = jax.lax.fori_loop(0, win_num, step, (h0, c0), unroll=unroll)

    # Head: Linear(hidden -> 1) + Softplus, emitted lane-dense as (1, tile_b):
    # contract hidden of (1, hidden) against hidden of (tile_b, hidden).
    logits = jax.lax.dot_general(
        wout_ref[...], h.astype(wout_ref.dtype),
        dimension_numbers=(((1,), (1,)), ((), ())),
        preferred_element_type=jnp.float32) + bout_ref[0, 0]
    o_ref[...] = jax.nn.softplus(logits)


def pack_lstm_weights(params):
    """One-time weight prep:
    - fuse the 4 LSTM gates along the output axis (PyTorch order [i, f, g, o]),
    - fold the t-embedding Linear into the input->gates projection (in f32),
    - cast matmul operands to bf16 (biases stay f32)."""
    w_ih = params["w_ih"]            # (4, emb_dim, hidden)
    w_hh = params["w_hh"]            # (4, hidden, hidden)
    bg = params["b_gates"]           # (4, 1, hidden)   (= b_ih + b_hh)
    emb_dim, hidden = w_ih.shape[1], w_ih.shape[2]

    wih_all = jnp.transpose(w_ih, (1, 0, 2)).reshape(emb_dim, 4 * hidden)
    whh_all = jnp.transpose(w_hh, (1, 0, 2)).reshape(hidden, 4 * hidden)
    bg_all = bg.reshape(1, 4 * hidden)

    w_comb = (params["w_emb"] @ wih_all).astype(jnp.bfloat16)   # (t_feat, 4H)
    b_comb = params["b_emb"] @ wih_all + bg_all                 # (1, 4H) f32
    whh_bf = whh_all.astype(jnp.bfloat16)
    wout_row = params["w_out"].reshape(1, hidden).astype(jnp.bfloat16)
    return w_comb, b_comb, whh_bf, wout_row


def rnn_model_forward(xt, params, *, win_num, t_feature_dim, emb_dim,
                      hidden_dim, tile_b_max=128):
    del emb_dim  # folded into w_comb
    batch = xt.shape[0]
    four_h = 4 * hidden_dim

    # Batch tile: multiple of 16 sublanes (bf16 packing).  When the batch is
    # actually tiled the tile is 128, so the lane-dense output blocks stay
    # 128-aligned.  Re-derive tile_b_max per generation if VMEM gets tight
    # (v7x has only 64 MiB of VMEM per TensorCore).
    tile_b = min(tile_b_max, _round_up(batch, 16))
    tile_b = _round_up(tile_b, 16)
    padded = _round_up(batch, tile_b)
    num_tiles = padded // tile_b

    # glue: (batch, win_num*t_feat) -> time-major (win_num, padded, t_feat),
    # explicit padding of the batch remainder (VMEM has no bounds check).
    x3 = xt.reshape(batch, win_num, t_feature_dim).transpose(1, 0, 2)
    if padded != batch:
        x3 = jnp.pad(x3, ((0, 0), (0, padded - batch), (0, 0)))
    x3 = x3.astype(jnp.bfloat16)

    w_comb, b_comb, whh_bf, wout_row = pack_lstm_weights(params)

    kernel = functools.partial(
        rnn_lstm_kernel, win_num=win_num, hidden=hidden_dim, tile_b=tile_b,
        unroll=bool(win_num <= 16))

    flops = (2 * padded * win_num * (t_feature_dim + hidden_dim) * four_h
             + 2 * padded * hidden_dim)
    transcendentals = padded * win_num * (four_h + hidden_dim) + padded
    bytes_accessed = int(x3.size * 2 + w_comb.size * 2 + b_comb.size * 4
                         + whh_bf.size * 2 + wout_row.size * 2 + 4 + padded * 4)

    out = pl.pallas_call(
        kernel,
        out_shape=jax.ShapeDtypeStruct((1, padded), jnp.float32),
        grid_spec=pltpu.PrefetchScalarGridSpec(
            num_scalar_prefetch=0,
            grid=(num_tiles,),
            in_specs=[
                pl.BlockSpec((win_num, tile_b, t_feature_dim),
                             lambda i: (0, i, 0)),
                pl.BlockSpec((t_feature_dim, four_h), lambda i: (0, 0)),
                pl.BlockSpec((1, four_h), lambda i: (0, 0)),
                pl.BlockSpec((hidden_dim, four_h), lambda i: (0, 0)),
                pl.BlockSpec((1, hidden_dim), lambda i: (0, 0)),
                pl.BlockSpec(memory_space=pltpu.MemorySpace.SMEM),
            ],
            out_specs=pl.BlockSpec((1, tile_b), lambda i: (0, i)),
            scratch_shapes=[pltpu.VMEM((win_num, tile_b, four_h), jnp.float32)],
        ),
        compiler_params=pltpu.CompilerParams(
            dimension_semantics=("parallel",),
            vmem_limit_bytes=64 * 1024 * 1024,
        ),
        cost_estimate=pl.CostEstimate(
            flops=int(flops), transcendentals=int(transcendentals),
            bytes_accessed=bytes_accessed),
    )(x3, w_comb, b_comb, whh_bf, wout_row, params["b_out"])
    return out[0, :batch]          # (batch,)


def make_params(key, t_feature_dim, emb_dim, hidden_dim):
    ks = jax.random.split(key, 8)
    s = 0.1
    w_emb = jax.random.normal(ks[0], (t_feature_dim, emb_dim), jnp.float32) * s
    b_emb = jax.random.normal(ks[1], (1, emb_dim), jnp.float32) * s
    w_ih = jax.random.normal(ks[2], (4, emb_dim, hidden_dim), jnp.float32) * s
    w_hh = jax.random.normal(ks[3], (4, hidden_dim, hidden_dim), jnp.float32) * s
    b_ih = jax.random.normal(ks[4], (4, 1, hidden_dim), jnp.float32) * s
    b_hh = jax.random.normal(ks[5], (4, 1, hidden_dim), jnp.float32) * s
    w_out = jax.random.normal(ks[6], (hidden_dim, 1), jnp.float32) * s
    b_out = jax.random.normal(ks[7], (1, 1), jnp.float32) * s
    return {
        "w_emb": w_emb, "b_emb": b_emb,
        "w_ih": w_ih, "w_hh": w_hh, "b_gates": b_ih + b_hh,
        "w_out": w_out, "b_out": b_out,
    }


def reference_forward(xt, params, *, win_num, t_feature_dim, emb_dim, hidden_dim):
    """Pure-JAX f32 reference mirroring the PyTorch forward (unfused weights)."""
    batch = xt.shape[0]
    x = xt.reshape(batch, win_num, t_feature_dim)
    emb = x @ params["w_emb"] + params["b_emb"]            # (batch, win_num, emb)
    h = jnp.zeros((batch, hidden_dim), jnp.float32)
    c = jnp.zeros((batch, hidden_dim), jnp.float32)
    for t in range(win_num):
        xt_ = emb[:, t, :]
        gates = [xt_ @ params["w_ih"][k] + h @ params["w_hh"][k] + params["b_gates"][k]
                 for k in range(4)]
        i = jax.nn.sigmoid(gates[0]); f = jax.nn.sigmoid(gates[1])
        g = jnp.tanh(gates[2]);       o = jax.nn.sigmoid(gates[3])
        c = f * c + i * g
        h = o * jnp.tanh(c)
    pred = jax.nn.softplus(h @ params["w_out"] + params["b_out"])
    return pred.reshape(-1)


if __name__ == "__main__":
    # Small shapes consistent with the module's forward.
    batch, win_num = 2, 8
    t_feature_dim, emb_dim, hidden_dim = 16, 32, 32

    key = jax.random.PRNGKey(0)
    kx, kp = jax.random.split(key)
    xt = jax.random.normal(kx, (batch, win_num * t_feature_dim), jnp.float32)
    params = make_params(kp, t_feature_dim, emb_dim, hidden_dim)

    out = rnn_model_forward(xt, params, win_num=win_num,
                            t_feature_dim=t_feature_dim,
                            emb_dim=emb_dim, hidden_dim=hidden_dim)
    out = jax.block_until_ready(out)

    ref = reference_forward(xt, params, win_num=win_num,
                            t_feature_dim=t_feature_dim,
                            emb_dim=emb_dim, hidden_dim=hidden_dim)
    # Looser tolerance: matmul operands are bf16 (f32 accumulation) and the
    # w_emb @ W_ih fold reassociates the f32 embedding matmul.
    if not np.allclose(np.asarray(out), np.asarray(ref), rtol=3e-2, atol=3e-3):
        raise AssertionError("Pallas kernel does not match JAX reference")

    print("KERNEL_OK")
</pallas_src>

<mosaic_0001>
module attributes {stable_mosaic.version = 11 : i64} {
  func.func @rnn_lstm_kernel(%arg0: i32, %arg1: memref<8x16x16xbf16, #tpu.memory_space<vmem>>, %arg2: memref<16x128xbf16, #tpu.memory_space<vmem>>, %arg3: memref<1x128xf32, #tpu.memory_space<vmem>>, %arg4: memref<32x128xbf16, #tpu.memory_space<vmem>>, %arg5: memref<1x32xbf16, #tpu.memory_space<vmem>>, %arg6: memref<1x1xf32, #tpu.memory_space<smem>>, %arg7: memref<1x16xf32, #tpu.memory_space<vmem>>, %arg8: memref<8x16x128xf32, #tpu.memory_space<vmem>>) attributes {dimension_semantics = [#tpu.dimension_semantics<parallel>], iteration_bounds = array<i64: 1>, scalar_prefetch = 0 : i64, scratch_operands = 1 : i64, tpu.core_type = #tpu.core_type<tc>, window_params = [{transform_indices = @transform_0, window_bounds = array<i64: 8, 16, 16>}, {pipeline_mode = #tpu.pipeline_mode<synchronous>, transform_indices = @transform_1, window_bounds = array<i64: 16, 128>}, {pipeline_mode = #tpu.pipeline_mode<synchronous>, transform_indices = @transform_2, window_bounds = array<i64: 1, 128>}, {pipeline_mode = #tpu.pipeline_mode<synchronous>, transform_indices = @transform_3, window_bounds = array<i64: 32, 128>}, {pipeline_mode = #tpu.pipeline_mode<synchronous>, transform_indices = @transform_4, window_bounds = array<i64: 1, 32>}, {transform_indices = @transform_5, window_bounds = array<i64: 1, 1>}, {transform_indices = @transform_6, window_bounds = array<i64: 1, 16>}]} {
    %c0 = arith.constant 0 : index
    %c0_0 = arith.constant 0 : index
    %c0_1 = arith.constant 0 : index
    %0 = vector.load %arg1[%c0, %c0_0, %c0_1] : memref<8x16x16xbf16, #tpu.memory_space<vmem>>, vector<8x16x16xbf16>
    %1 = vector.shape_cast %0 : vector<8x16x16xbf16> to vector<128x16xbf16>
    %c0_2 = arith.constant 0 : index
    %c0_3 = arith.constant 0 : index
    %2 = vector.load %arg2[%c0_2, %c0_3] : memref<16x128xbf16, #tpu.memory_space<vmem>>, vector<16x128xbf16>
    %cst = arith.constant dense<0.000000e+00> : vector<128x128xf32>
    %3 = tpu.matmul %1, %2, %cst {dimension_numbers = #tpu.dot_dimension_numbers<[1], [0], [0], [1], [0, 0, 1, 1], [], []>} : vector<128x16xbf16>, vector<16x128xbf16>, vector<128x128xf32> -> vector<128x128xf32>
    %4 = vector.shape_cast %3 : vector<128x128xf32> to vector<8x16x128xf32>
    %c0_4 = arith.constant 0 : index
    %c0_5 = arith.constant 0 : index
    %5 = vector.load %arg3[%c0_4, %c0_5] : memref<1x128xf32, #tpu.memory_space<vmem>>, vector<1x128xf32>
    %6 = vector.shape_cast %5 : vector<1x128xf32> to vector<1x1x128xf32>
    %7 = vector.broadcast %6 : vector<1x1x128xf32> to vector<8x16x128xf32>
    %8 = arith.addf %4, %7 : vector<8x16x128xf32>
    %c0_6 = arith.constant 0 : index
    %c0_7 = arith.constant 0 : index
    %c0_8 = arith.constant 0 : index
    %9 = vector.load %arg8[%c0_6, %c0_7, %c0_8] : memref<8x16x128xf32, #tpu.memory_space<vmem>>, vector<8x16x128xf32>
    tpu.vector_store %arg8[%c0_6, %c0_7, %c0_8], %8 {strides = array<i32>} : memref<8x16x128xf32, #tpu.memory_space<vmem>>, vector<8x16x128xf32>,
    %c0_9 = arith.constant 0 : index
    %c0_10 = arith.constant 0 : index
    %10 = vector.load %arg4[%c0_9, %c0_10] : memref<32x128xbf16, #tpu.memory_space<vmem>>, vector<32x128xbf16>
    %11 = tpu.iota {dimensions = array<i32: 1>} : vector<1x128xi32>
    %c64_i32 = arith.constant 64 : i32
    %12 = vector.broadcast %c64_i32 : i32 to vector<1x128xi32>
    %13 = arith.cmpi sge, %11, %12 : vector<1x128xi32>
    %c96_i32 = arith.constant 96 : i32
    %14 = vector.broadcast %c96_i32 : i32 to vector<1x128xi32>
    %15 = arith.cmpi slt, %11, %14 : vector<1x128xi32>
    %16 = arith.andi %13, %15 : vector<1x128xi1>
    %cst_11 = arith.constant 0.000000e+00 : f32
    %17 = vector.broadcast %cst_11 : f32 to vector<16x32xf32>
    %cst_12 = arith.constant 0.000000e+00 : f32
    %18 = vector.broadcast %cst_12 : f32 to vector<16x32xf32>
    %c0_i32 = arith.constant 0 : i32
    %19 = arith.index_cast %c0_i32 : i32 to index
    %c0_13 = arith.constant 0 : index
    %c0_14 = arith.constant 0 : index
    %20 = vector.load %arg8[%19, %c0_13, %c0_14] : memref<8x16x128xf32, #tpu.memory_space<vmem>>, vector<1x16x128xf32>
    %21 = vector.shape_cast %20 : vector<1x16x128xf32> to vector<16x128xf32>
    %22 = arith.truncf %17 : vector<16x32xf32> to vector<16x32xbf16>
    %cst_15 = arith.constant dense<0.000000e+00> : vector<16x128xf32>
    %23 = tpu.matmul %22, %10, %cst_15 {dimension_numbers = #tpu.dot_dimension_numbers<[1], [0], [0], [1], [0, 0, 1, 1], [], []>} : vector<16x32xbf16>, vector<32x128xbf16>, vector<16x128xf32> -> vector<16x128xf32>
    %24 = arith.addf %21, %23 : vector<16x128xf32>
    %25 = math.tanh %24 : vector<16x128xf32>
    %26 = arith.negf %24 : vector<16x128xf32>
    %27 = math.exp %26 : vector<16x128xf32>
    %cst_16 = arith.constant 1.000000e+00 : f32
    %28 = vector.broadcast %cst_16 : f32 to vector<16x128xf32>
    %29 = arith.addf %28, %27 : vector<16x128xf32>
    %30 = arith.divf %28, %29 : vector<16x128xf32>
    %31 = vector.shape_cast %16 : vector<1x128xi1> to vector<1x128xi1>
    %32 = vector.broadcast %31 : vector<1x128xi1> to vector<16x128xi1>
    %33 = arith.select %32, %25, %30 : vector<16x128xi1>, vector<16x128xf32>
    %34 = vector.extract_strided_slice %33 {offsets = [0, 0], sizes = [16, 32], strides = [1, 1]} : vector<16x128xf32> to vector<16x32xf32>
    %35 = vector.extract_strided_slice %33 {offsets = [0, 32], sizes = [16, 32], strides = [1, 1]} : vector<16x128xf32> to vector<16x32xf32>
    %36 = vector.extract_strided_slice %33 {offsets = [0, 64], sizes = [16, 32], strides = [1, 1]} : vector<16x128xf32> to vector<16x32xf32>
    %37 = vector.extract_strided_slice %33 {offsets = [0, 96], sizes = [16, 32], strides = [1, 1]} : vector<16x128xf32> to vector<16x32xf32>
    %38 = arith.mulf %35, %18 : vector<16x32xf32>
    %39 = arith.mulf %34, %36 : vector<16x32xf32>
    %40 = arith.addf %38, %39 : vector<16x32xf32>
    %41 = math.tanh %40 : vector<16x32xf32>
    %42 = arith.mulf %37, %41 : vector<16x32xf32>
    %c1_i32 = arith.constant 1 : i32
    %43 = arith.index_cast %c1_i32 : i32 to index
    %c0_17 = arith.constant 0 : index
    %c0_18 = arith.constant 0 : index
    %44 = vector.load %arg8[%43, %c0_17, %c0_18] : memref<8x16x128xf32, #tpu.memory_space<vmem>>, vector<1x16x128xf32>
    %45 = vector.shape_cast %44 : vector<1x16x128xf32> to vector<16x128xf32>
    %46 = arith.truncf %42 : vector<16x32xf32> to vector<16x32xbf16>
    %cst_19 = arith.constant dense<0.000000e+00> : vector<16x128xf32>
    %47 = tpu.matmul %46, %10, %cst_19 {dimension_numbers = #tpu.dot_dimension_numbers<[1], [0], [0], [1], [0, 0, 1, 1], [], []>} : vector<16x32xbf16>, vector<32x128xbf16>, vector<16x128xf32> -> vector<16x128xf32>
    %48 = arith.addf %45, %47 : vector<16x128xf32>
    %49 = math.tanh %48 : vector<16x128xf32>
    %50 = arith.negf %48 : vector<16x128xf32>
    %51 = math.exp %50 : vector<16x128xf32>
    %cst_20 = arith.constant 1.000000e+00 : f32
    %52 = vector.broadcast %cst_20 : f32 to vector<16x128xf32>
    %53 = arith.addf %52, %51 : vector<16x128xf32>
    %54 = arith.divf %52, %53 : vector<16x128xf32>
    %55 = vector.shape_cast %16 : vector<1x128xi1> to vector<1x128xi1>
    %56 = vector.broadcast %55 : vector<1x128xi1> to vector<16x128xi1>
    %57 = arith.select %56, %49, %54 : vector<16x128xi1>, vector<16x128xf32>
    %58 = vector.extract_strided_slice %57 {offsets = [0, 0], sizes = [16, 32], strides = [1, 1]} : vector<16x128xf32> to vector<16x32xf32>
    %59 = vector.extract_strided_slice %57 {offsets = [0, 32], sizes = [16, 32], strides = [1, 1]} : vector<16x128xf32> to vector<16x32xf32>
    %60 = vector.extract_strided_slice %57 {offsets = [0, 64], sizes = [16, 32], strides = [1, 1]} : vector<16x128xf32> to vector<16x32xf32>
    %61 = vector.extract_strided_slice %57 {offsets = [0, 96], sizes = [16, 32], strides = [1, 1]} : vector<16x128xf32> to vector<16x32xf32>
    %62 = arith.mulf %59, %40 : vector<16x32xf32>
    %63 = arith.mulf %58, %60 : vector<16x32xf32>
    %64 = arith.addf %62, %63 : vector<16x32xf32>
    %65 = math.tanh %64 : vector<16x32xf32>
    %66 = arith.mulf %61, %65 : vector<16x32xf32>
    %c2_i32 = arith.constant 2 : i32
    %67 = arith.index_cast %c2_i32 : i32 to index
    %c0_21 = arith.constant 0 : index
    %c0_22 = arith.constant 0 : index
    %68 = vector.load %arg8[%67, %c0_21, %c0_22] : memref<8x16x128xf32, #tpu.memory_space<vmem>>, vector<1x16x128xf32>
    %69 = vector.shape_cast %68 : vector<1x16x128xf32> to vector<16x128xf32>
    %70 = arith.truncf %66 : vector<16x32xf32> to vector<16x32xbf16>
    %cst_23 = arith.constant dense<0.000000e+00> : vector<16x128xf32>
    %71 = tpu.matmul %70, %10, %cst_23 {dimension_numbers = #tpu.dot_dimension_numbers<[1], [0], [0], [1], [0, 0, 1, 1], [], []>} : vector<16x32xbf16>, vector<32x128xbf16>, vector<16x128xf32> -> vector<16x128xf32>
    %72 = arith.addf %69, %71 : vector<16x128xf32>
    %73 = math.tanh %72 : vector<16x128xf32>
    %74 = arith.negf %72 : vector<16x128xf32>
    %75 = math.exp %74 : vector<16x128xf32>
    %cst_24 = arith.constant 1.000000e+00 : f32
    %76 = vector.broadcast %cst_24 : f32 to vector<16x128xf32>
    %77 = arith.addf %76, %75 : vector<16x128xf32>
    %78 = arith.divf %76, %77 : vector<16x128xf32>
    %79 = vector.shape_cast %16 : vector<1x128xi1> to vector<1x128xi1>
    %80 = vector.broadcast %79 : vector<1x128xi1> to vector<16x128xi1>
    %81 = arith.select %80, %73, %78 : vector<16x128xi1>, vector<16x128xf32>
    %82 = vector.extract_strided_slice %81 {offsets = [0, 0], sizes = [16, 32], strides = [1, 1]} : vector<16x128xf32> to vector<16x32xf32>
    %83 = vector.extract_strided_slice %81 {offsets = [0, 32], sizes = [16, 32], strides = [1, 1]} : vector<16x128xf32> to vector<16x32xf32>
    %84 = vector.extract_strided_slice %81 {offsets = [0, 64], sizes = [16, 32], strides = [1, 1]} : vector<16x128xf32> to vector<16x32xf32>
    %85 = vector.extract_strided_slice %81 {offsets = [0, 96], sizes = [16, 32], strides = [1, 1]} : vector<16x128xf32> to vector<16x32xf32>
    %86 = arith.mulf %83, %64 : vector<16x32xf32>
    %87 = arith.mulf %82, %84 : vector<16x32xf32>
    %88 = arith.addf %86, %87 : vector<16x32xf32>
    %89 = math.tanh %88 : vector<16x32xf32>
    %90 = arith.mulf %85, %89 : vector<16x32xf32>
    %c3_i32 = arith.constant 3 : i32
    %91 = arith.index_cast %c3_i32 : i32 to index
    %c0_25 = arith.constant 0 : index
    %c0_26 = arith.constant 0 : index
    %92 = vector.load %arg8[%91, %c0_25, %c0_26] : memref<8x16x128xf32, #tpu.memory_space<vmem>>, vector<1x16x128xf32>
    %93 = vector.shape_cast %92 : vector<1x16x128xf32> to vector<16x128xf32>
    %94 = arith.truncf %90 : vector<16x32xf32> to vector<16x32xbf16>
    %cst_27 = arith.constant dense<0.000000e+00> : vector<16x128xf32>
    %95 = tpu.matmul %94, %10, %cst_27 {dimension_numbers = #tpu.dot_dimension_numbers<[1], [0], [0], [1], [0, 0, 1, 1], [], []>} : vector<16x32xbf16>, vector<32x128xbf16>, vector<16x128xf32> -> vector<16x128xf32>
    %96 = arith.addf %93, %95 : vector<16x128xf32>
    %97 = math.tanh %96 : vector<16x128xf32>
    %98 = arith.negf %96 : vector<16x128xf32>
    %99 = math.exp %98 : vector<16x128xf32>
    %cst_28 = arith.constant 1.000000e+00 : f32
    %100 = vector.broadcast %cst_28 : f32 to vector<16x128xf32>
    %101 = arith.addf %100, %99 : vector<16x128xf32>
    %102 = arith.divf %100, %101 : vector<16x128xf32>
    %103 = vector.shape_cast %16 : vector<1x128xi1> to vector<1x128xi1>
    %104 = vector.broadcast %103 : vector<1x128xi1> to vector<16x128xi1>
    %105 = arith.select %104, %97, %102 : vector<16x128xi1>, vector<16x128xf32>
    %106 = vector.extract_strided_slice %105 {offsets = [0, 0], sizes = [16, 32], strides = [1, 1]} : vector<16x128xf32> to vector<16x32xf32>
    %107 = vector.extract_strided_slice %105 {offsets = [0, 32], sizes = [16, 32], strides = [1, 1]} : vector<16x128xf32> to vector<16x32xf32>
    %108 = vector.extract_strided_slice %105 {offsets = [0, 64], sizes = [16, 32], strides = [1, 1]} : vector<16x128xf32> to vector<16x32xf32>
    %109 = vector.extract_strided_slice %105 {offsets = [0, 96], sizes = [16, 32], strides = [1, 1]} : vector<16x128xf32> to vector<16x32xf32>
    %110 = arith.mulf %107, %88 : vector<16x32xf32>
    %111 = arith.mulf %106, %108 : vector<16x32xf32>
    %112 = arith.addf %110, %111 : vector<16x32xf32>
    %113 = math.tanh %112 : vector<16x32xf32>
    %114 = arith.mulf %109, %113 : vector<16x32xf32>
    %c4_i32 = arith.constant 4 : i32
    %115 = arith.index_cast %c4_i32 : i32 to index
    %c0_29 = arith.constant 0 : index
    %c0_30 = arith.constant 0 : index
    %116 = vector.load %arg8[%115, %c0_29, %c0_30] : memref<8x16x128xf32, #tpu.memory_space<vmem>>, vector<1x16x128xf32>
    %117 = vector.shape_cast %116 : vector<1x16x128xf32> to vector<16x128xf32>
    %118 = arith.truncf %114 : vector<16x32xf32> to vector<16x32xbf16>
    %cst_31 = arith.constant dense<0.000000e+00> : vector<16x128xf32>
    %119 = tpu.matmul %118, %10, %cst_31 {dimension_numbers = #tpu.dot_dimension_numbers<[1], [0], [0], [1], [0, 0, 1, 1], [], []>} : vector<16x32xbf16>, vector<32x128xbf16>, vector<16x128xf32> -> vector<16x128xf32>
    %120 = arith.addf %117, %119 : vector<16x128xf32>
    %121 = math.tanh %120 : vector<16x128xf32>
    %122 = arith.negf %120 : vector<16x128xf32>
    %123 = math.exp %122 : vector<16x128xf32>
    %cst_32 = arith.constant 1.000000e+00 : f32
    %124 = vector.broadcast %cst_32 : f32 to vector<16x128xf32>
    %125 = arith.addf %124, %123 : vector<16x128xf32>
    %126 = arith.divf %124, %125 : vector<16x128xf32>
    %127 = vector.shape_cast %16 : vector<1x128xi1> to vector<1x128xi1>
    %128 = vector.broadcast %127 : vector<1x128xi1> to vector<16x128xi1>
    %129 = arith.select %128, %121, %126 : vector<16x128xi1>, vector<16x128xf32>
    %130 = vector.extract_strided_slice %129 {offsets = [0, 0], sizes = [16, 32], strides = [1, 1]} : vector<16x128xf32> to vector<16x32xf32>
    %131 = vector.extract_strided_slice %129 {offsets = [0, 32], sizes = [16, 32], strides = [1, 1]} : vector<16x128xf32> to vector<16x32xf32>
    %132 = vector.extract_strided_slice %129 {offsets = [0, 64], sizes = [16, 32], strides = [1, 1]} : vector<16x128xf32> to vector<16x32xf32>
    %133 = vector.extract_strided_slice %129 {offsets = [0, 96], sizes = [16, 32], strides = [1, 1]} : vector<16x128xf32> to vector<16x32xf32>
    %134 = arith.mulf %131, %112 : vector<16x32xf32>
    %135 = arith.mulf %130, %132 : vector<16x32xf32>
    %136 = arith.addf %134, %135 : vector<16x32xf32>
    %137 = math.tanh %136 : vector<16x32xf32>
    %138 = arith.mulf %133, %137 : vector<16x32xf32>
    %c5_i32 = arith.constant 5 : i32
    %139 = arith.index_cast %c5_i32 : i32 to index
    %c0_33 = arith.constant 0 : index
    %c0_34 = arith.constant 0 : index
    %140 = vector.load %arg8[%139, %c0_33, %c0_34] : memref<8x16x128xf32, #tpu.memory_space<vmem>>, vector<1x16x128xf32>
    %141 = vector.shape_cast %140 : vector<1x16x128xf32> to vector<16x128xf32>
    %142 = arith.truncf %138 : vector<16x32xf32> to vector<16x32xbf16>
    %cst_35 = arith.constant dense<0.000000e+00> : vector<16x128xf32>
    %143 = tpu.matmul %142, %10, %cst_35 {dimension_numbers = #tpu.dot_dimension_numbers<[1], [0], [0], [1], [0, 0, 1, 1], [], []>} : vector<16x32xbf16>, vector<32x128xbf16>, vector<16x128xf32> -> vector<16x128xf32>
    %144 = arith.addf %141, %143 : vector<16x128xf32>
    %145 = math.tanh %144 : vector<16x128xf32>
    %146 = arith.negf %144 : vector<16x128xf32>
    %147 = math.exp %146 : vector<16x128xf32>
    %cst_36 = arith.constant 1.000000e+00 : f32
    %148 = vector.broadcast %cst_36 : f32 to vector<16x128xf32>
    %149 = arith.addf %148, %147 : vector<16x128xf32>
    %150 = arith.divf %148, %149 : vector<16x128xf32>
    %151 = vector.shape_cast %16 : vector<1x128xi1> to vector<1x128xi1>
    %152 = vector.broadcast %151 : vector<1x128xi1> to vector<16x128xi1>
    %153 = arith.select %152, %145, %150 : vector<16x128xi1>, vector<16x128xf32>
    %154 = vector.extract_strided_slice %153 {offsets = [0, 0], sizes = [16, 32], strides = [1, 1]} : vector<16x128xf32> to vector<16x32xf32>
    %155 = vector.extract_strided_slice %153 {offsets = [0, 32], sizes = [16, 32], strides = [1, 1]} : vector<16x128xf32> to vector<16x32xf32>
    %156 = vector.extract_strided_slice %153 {offsets = [0, 64], sizes = [16, 32], strides = [1, 1]} : vector<16x128xf32> to vector<16x32xf32>
    %157 = vector.extract_strided_slice %153 {offsets = [0, 96], sizes = [16, 32], strides = [1, 1]} : vector<16x128xf32> to vector<16x32xf32>
    %158 = arith.mulf %155, %136 : vector<16x32xf32>
    %159 = arith.mulf %154, %156 : vector<16x32xf32>
    %160 = arith.addf %158, %159 : vector<16x32xf32>
    %161 = math.tanh %160 : vector<16x32xf32>
    %162 = arith.mulf %157, %161 : vector<16x32xf32>
    %c6_i32 = arith.constant 6 : i32
    %163 = arith.index_cast %c6_i32 : i32 to index
    %c0_37 = arith.constant 0 : index
    %c0_38 = arith.constant 0 : index
    %164 = vector.load %arg8[%163, %c0_37, %c0_38] : memref<8x16x128xf32, #tpu.memory_space<vmem>>, vector<1x16x128xf32>
    %165 = vector.shape_cast %164 : vector<1x16x128xf32> to vector<16x128xf32>
    %166 = arith.truncf %162 : vector<16x32xf32> to vector<16x32xbf16>
    %cst_39 = arith.constant dense<0.000000e+00> : vector<16x128xf32>
    %167 = tpu.matmul %166, %10, %cst_39 {dimension_numbers = #tpu.dot_dimension_numbers<[1], [0], [0], [1], [0, 0, 1, 1], [], []>} : vector<16x32xbf16>, vector<32x128xbf16>, vector<16x128xf32> -> vector<16x128xf32>
    %168 = arith.addf %165, %167 : vector<16x128xf32>
    %169 = math.tanh %168 : vector<16x128xf32>
    %170 = arith.negf %168 : vector<16x128xf32>
    %171 = math.exp %170 : vector<16x128xf32>
    %cst_40 = arith.constant 1.000000e+00 : f32
    %172 = vector.broadcast %cst_40 : f32 to vector<16x128xf32>
    %173 = arith.addf %172, %171 : vector<16x128xf32>
    %174 = arith.divf %172, %173 : vector<16x128xf32>
    %175 = vector.shape_cast %16 : vector<1x128xi1> to vector<1x128xi1>
    %176 = vector.broadcast %175 : vector<1x128xi1> to vector<16x128xi1>
    %177 = arith.select %176, %169, %174 : vector<16x128xi1>, vector<16x128xf32>
    %178 = vector.extract_strided_slice %177 {offsets = [0, 0], sizes = [16, 32], strides = [1, 1]} : vector<16x128xf32> to vector<16x32xf32>
    %179 = vector.extract_strided_slice %177 {offsets = [0, 32], sizes = [16, 32], strides = [1, 1]} : vector<16x128xf32> to vector<16x32xf32>
    %180 = vector.extract_strided_slice %177 {offsets = [0, 64], sizes = [16, 32], strides = [1, 1]} : vector<16x128xf32> to vector<16x32xf32>
    %181 = vector.extract_strided_slice %177 {offsets = [0, 96], sizes = [16, 32], strides = [1, 1]} : vector<16x128xf32> to vector<16x32xf32>
    %182 = arith.mulf %179, %160 : vector<16x32xf32>
    %183 = arith.mulf %178, %180 : vector<16x32xf32>
    %184 = arith.addf %182, %183 : vector<16x32xf32>
    %185 = math.tanh %184 : vector<16x32xf32>
    %186 = arith.mulf %181, %185 : vector<16x32xf32>
    %c7_i32 = arith.constant 7 : i32
    %187 = arith.index_cast %c7_i32 : i32 to index
    %c0_41 = arith.constant 0 : index
    %c0_42 = arith.constant 0 : index
    %188 = vector.load %arg8[%187, %c0_41, %c0_42] : memref<8x16x128xf32, #tpu.memory_space<vmem>>, vector<1x16x128xf32>
    %189 = vector.shape_cast %188 : vector<1x16x128xf32> to vector<16x128xf32>
    %190 = arith.truncf %186 : vector<16x32xf32> to vector<16x32xbf16>
    %cst_43 = arith.constant dense<0.000000e+00> : vector<16x128xf32>
    %191 = tpu.matmul %190, %10, %cst_43 {dimension_numbers = #tpu.dot_dimension_numbers<[1], [0], [0], [1], [0, 0, 1, 1], [], []>} : vector<16x32xbf16>, vector<32x128xbf16>, vector<16x128xf32> -> vector<16x128xf32>
    %192 = arith.addf %189, %191 : vector<16x128xf32>
    %193 = math.tanh %192 : vector<16x128xf32>
    %194 = arith.negf %192 : vector<16x128xf32>
    %195 = math.exp %194 : vector<16x128xf32>
    %cst_44 = arith.constant 1.000000e+00 : f32
    %196 = vector.broadcast %cst_44 : f32 to vector<16x128xf32>
    %197 = arith.addf %196, %195 : vector<16x128xf32>
    %198 = arith.divf %196, %197 : vector<16x128xf32>
    %199 = vector.shape_cast %16 : vector<1x128xi1> to vector<1x128xi1>
    %200 = vector.broadcast %199 : vector<1x128xi1> to vector<16x128xi1>
    %201 = arith.select %200, %193, %198 : vector<16x128xi1>, vector<16x128xf32>
    %202 = vector.extract_strided_slice %201 {offsets = [0, 0], sizes = [16, 32], strides = [1, 1]} : vector<16x128xf32> to vector<16x32xf32>
    %203 = vector.extract_strided_slice %201 {offsets = [0, 32], sizes = [16, 32], strides = [1, 1]} : vector<16x128xf32> to vector<16x32xf32>
    %204 = vector.extract_strided_slice %201 {offsets = [0, 64], sizes = [16, 32], strides = [1, 1]} : vector<16x128xf32> to vector<16x32xf32>
    %205 = vector.extract_strided_slice %201 {offsets = [0, 96], sizes = [16, 32], strides = [1, 1]} : vector<16x128xf32> to vector<16x32xf32>
    %206 = arith.mulf %203, %184 : vector<16x32xf32>
    %207 = arith.mulf %202, %204 : vector<16x32xf32>
    %208 = arith.addf %206, %207 : vector<16x32xf32>
    %209 = math.tanh %208 : vector<16x32xf32>
    %210 = arith.mulf %205, %209 : vector<16x32xf32>
    %c8_i32 = arith.constant 8 : i32
    %c0_45 = arith.constant 0 : index
    %c0_46 = arith.constant 0 : index
    %211 = vector.load %arg5[%c0_45, %c0_46] : memref<1x32xbf16, #tpu.memory_space<vmem>>, vector<1x32xbf16>
    %212 = arith.truncf %210 : vector<16x32xf32> to vector<16x32xbf16>
    %cst_47 = arith.constant dense<0.000000e+00> : vector<1x16xf32>
    %213 = tpu.matmul %211, %212, %cst_47 {dimension_numbers = #tpu.dot_dimension_numbers<[1], [1], [0], [0], [0, 0, 1, 0], [], []>} : vector<1x32xbf16>, vector<16x32xbf16>, vector<1x16xf32> -> vector<1x16xf32>
    %c0_48 = arith.constant 0 : index
    %c0_49 = arith.constant 0 : index
    %214 = memref.load %arg6[%c0_48, %c0_49] : memref<1x1xf32, #tpu.memory_space<smem>>
    %215 = vector.broadcast %214 : f32 to vector<1x16xf32>
    %216 = arith.addf %213, %215 : vector<1x16xf32>
    %cst_50 = arith.constant 0.000000e+00 : f32
    %217 = vector.broadcast %cst_50 : f32 to vector<1x16xf32>
    %218 = arith.maximumf %216, %217 : vector<1x16xf32>
    %219 = vector.broadcast %cst_50 : f32 to vector<1x16xf32>
    %220 = arith.subf %216, %219 : vector<1x16xf32>
    %221 = arith.cmpf one, %220, %220 : vector<1x16xf32>
    %222 = vector.broadcast %cst_50 : f32 to vector<1x16xf32>
    %223 = arith.addf %216, %222 : vector<1x16xf32>
    %224 = math.absf %220 : vector<1x16xf32>
    %cst_51 = arith.constant 0.000000e+00 : f32
    %225 = vector.broadcast %cst_51 : f32 to vector<1x16xf32>
    %226 = arith.subf %225, %224 : vector<1x16xf32>
    %227 = math.exp %226 : vector<1x16xf32>
    %228 = math.log1p %227 : vector<1x16xf32>
    %229 = arith.addf %218, %228 : vector<1x16xf32>
    %230 = arith.select %221, %223, %229 : vector<1x16xi1>, vector<1x16xf32>
    %c0_52 = arith.constant 0 : index
    %c0_53 = arith.constant 0 : index
    %231 = vector.load %arg7[%c0_52, %c0_53] : memref<1x16xf32, #tpu.memory_space<vmem>>, vector<1x16xf32>
    tpu.vector_store %arg7[%c0_52, %c0_53], %230 {strides = array<i32>} : memref<1x16xf32, #tpu.memory_space<vmem>>, vector<1x16xf32>,
    return
  }
  func.func @transform_0(%arg0: i32) -> (i32, i32, i32) {
    %c0_i32 = arith.constant 0 : i32
    %c0_i32_0 = arith.constant 0 : i32
    %c0_i32_1 = arith.constant 0 : i32
    return %c0_i32, %arg0, %c0_i32_0 : i32, i32, i32
  }
  func.func @transform_1(%arg0: i32) -> (i32, i32) {
    %c0_i32 = arith.constant 0 : i32
    %c0_i32_0 = arith.constant 0 : i32
    %c0_i32_1 = arith.constant 0 : i32
    return %c0_i32, %c0_i32_0 : i32, i32
  }
  func.func @transform_2(%arg0: i32) -> (i32, i32) {
    %c0_i32 = arith.constant 0 : i32
    %c0_i32_0 = arith.constant 0 : i32
    %c0_i32_1 = arith.constant 0 : i32
    return %c0_i32, %c0_i32_0 : i32, i32
  }
  func.func @transform_3(%arg0: i32) -> (i32, i32) {
    %c0_i32 = arith.constant 0 : i32
    %c0_i32_0 = arith.constant 0 : i32
    %c0_i32_1 = arith.constant 0 : i32
    return %c0_i32, %c0_i32_0 : i32, i32
  }
  func.func @transform_4(%arg0: i32) -> (i32, i32) {
    %c0_i32 = arith.constant 0 : i32
    %c0_i32_0 = arith.constant 0 : i32
    %c0_i32_1 = arith.constant 0 : i32
    return %c0_i32, %c0_i32_0 : i32, i32
  }
  func.func @transform_5(%arg0: i32) -> (i32, i32) {
    %c0_i32 = arith.constant 0 : i32
    %c0_i32_0 = arith.constant 0 : i32
    %c0_i32_1 = arith.constant 0 : i32
    return %c0_i32, %c0_i32_0 : i32, i32
  }
  func.func @transform_6(%arg0: i32) -> (i32, i32) {
    %c0_i32 = arith.constant 0 : i32
    %c0_i32_0 = arith.constant 0 : i32
    return %c0_i32, %arg0 : i32, i32
  }
}

</mosaic_0001>

<llo_original>
// kernel: tpu_custom_call.1
$region0: #{tpu_custom_call.1}
  #allocation0 [shape = 'u32[]', space=smem, size = 0x4, offset = 0x4, fixed_abs, tag = 'smem constant byte address 0x4 - core index']
  #allocation1 [shape = 'u32[144,128]{1,0:T(1,128)}', space=vmem, size = 0x12000, scoped, tag = 'internal scratch']
  #allocation2 [shape = 'f32[8,16,128]{2,1,0:T(8,128)}', space=vmem, size = 0x10000, scoped, tag = 'scratch operand']
  #allocation3 [shape = 'f32[1,1]{1,0:T(1,128)S(6)}', space=smem, size = 0x200, scoped, tag = 'scoped memory for tpu_custom_call.1']
  %s0 = inlined_call_operand.hbm [shape: bf16[8,16,16], index: 0, kind: input, shape index: {}]
  %s1 = inlined_call_operand.hbm [shape: bf16[16,128], index: 1, kind: input, shape index: {}]
  %s2 = inlined_call_operand.vmem [shape: f32[1,128], index: 2, kind: input, shape index: {}]
  %s3 = inlined_call_operand.hbm [shape: bf16[32,128], index: 3, kind: input, shape index: {}]
  %s4 = inlined_call_operand.vmem [shape: bf16[1,32], index: 4, kind: input, shape index: {}]
  %s5 = inlined_call_operand.<no memory space> [shape: f32[1,1], index: 5, kind: input, shape index: {}]
  %s6 = inlined_call_operand.hbm [shape: f32[1,16], index: 6, kind: output, shape index: {}]
  %s7 = sld [smem:[#allocation0]]
  $region46: #{tpu_custom_call.1} parent=0
    _
  %s9 = ssub.s32 1, %s7
  %s10 = scalar_select 0, %s9, %s7
  %11 = sst [smem:[#allocation3]] %s5
  $region1: #{tpu_custom_call.1} parent=0
    #allocation4 [shape = 'u8[32768]{0}', space=vmem, size = 0x8000, scoped, tag = 'input window, operand 0, single buffered']
    #allocation5 [shape = 's32[1]{0}', space=sflag, size = 0x4, scoped, tag = 'scoped memory for tpu_custom_call.1']
    #allocation6 [shape = 's32[1]{0}', space=sflag, size = 0x4, scoped, tag = 'scoped memory for tpu_custom_call.1']
    #allocation7 [shape = 'u8[4096]{0}', space=vmem, size = 0x1000, scoped, tag = 'input window, operand 1, single buffered']
    #allocation8 [shape = 's32[1]{0}', space=sflag, size = 0x4, scoped, tag = 'scoped memory for tpu_custom_call.1']
    #allocation9 [shape = 'u8[8192]{0}', space=vmem, size = 0x2000, scoped, tag = 'input window, operand 3, single buffered']
    #allocation10 [shape = 'u8[512]{0}', space=vmem, size = 0x400, scoped, tag = 'output window, operand 0, single buffered']
    %12 = vsyncpa [#allocation5], 0
    %13 = vsyncpa [#allocation8], 0
    %14 = vsyncpa [#allocation6], 0
    // Predicated region
    $region2: #{tpu_custom_call.1} parent=1 // pred_check
      _
    $region3: #{tpu_custom_call.1} parent=1 // pred_check_branch
      %16 = sbr.rel (0) target = $region5
    $region4: #{tpu_custom_call.1} parent=1 // pred_region
      %s18 = ssub.s32 1024, 1024
      %19 = vsyncadd [#allocation5], %s18
      %s20 = sshll.u32 [#allocation4], 4
      %s21 = int_to_ptr.vmem [resolvable:$true] %s20
      %26 = dma.hbm_to_vmem [thread:$0]  %s0, 1024, %s21, [#allocation5], 64, 64, 4
    $region5: #{tpu_custom_call.1} parent=1 // pred_fallthru
      _
    // Predicated region
    $region6: #{tpu_custom_call.1} parent=1 // pred_check
      _
    $region7: #{tpu_custom_call.1} parent=1 // pred_check_branch
      %28 = sbr.rel (0) target = $region9
    $region8: #{tpu_custom_call.1} parent=1 // pred_region
      %s30 = ssub.s32 128, 128
      %31 = vsyncadd [#allocation8], %s30
      %s32 = sshll.u32 [#allocation7], 4
      %s33 = int_to_ptr.vmem [resolvable:$true] %s32
      %38 = dma.hbm_to_vmem [thread:$0]  %s1, 128, %s33, [#allocation8], 64, 64, 4
    $region9: #{tpu_custom_call.1} parent=1 // pred_fallthru
      _
    // Predicated region
    $region10: #{tpu_custom_call.1} parent=1 // pred_check
      _
    $region11: #{tpu_custom_call.1} parent=1 // pred_check_branch
      %40 = sbr.rel (0) target = $region13
    $region12: #{tpu_custom_call.1} parent=1 // pred_region
      _
    $region13: #{tpu_custom_call.1} parent=1 // pred_fallthru
      _
    // Predicated region
    $region14: #{tpu_custom_call.1} parent=1 // pred_check
      _
    $region15: #{tpu_custom_call.1} parent=1 // pred_check_branch
      %42 = sbr.rel (0) target = $region17
    $region16: #{tpu_custom_call.1} parent=1 // pred_region
      %s44 = ssub.s32 256, 256
      %45 = vsyncadd [#allocation8], %s44
      %s46 = sshll.u32 [#allocation9], 4
      %s47 = int_to_ptr.vmem [resolvable:$true] %s46
      %52 = dma.hbm_to_vmem [thread:$0]  %s3, 256, %s47, [#allocation8], 64, 64, 4
    $region17: #{tpu_custom_call.1} parent=1 // pred_fallthru
      _
    // Predicated region
    $region18: #{tpu_custom_call.1} parent=1 // pred_check
      _
    $region19: #{tpu_custom_call.1} parent=1 // pred_check_branch
      %54 = sbr.rel (0) target = $region21
    $region20: #{tpu_custom_call.1} parent=1 // pred_region
      _
    $region21: #{tpu_custom_call.1} parent=1 // pred_fallthru
      _
    // Predicated region
    $region22: #{tpu_custom_call.1} parent=1 // pred_check
      _
    $region23: #{tpu_custom_call.1} parent=1 // pred_check_branch
      %56 = sbr.rel (0) target = $region25
    $region24: #{tpu_custom_call.1} parent=1 // pred_region
      _
    $region25: #{tpu_custom_call.1} parent=1 // pred_fallthru
      _
    // Predicated region
    $region26: #{tpu_custom_call.1} parent=1 // pred_check
      _
    $region27: #{tpu_custom_call.1} parent=1 // pred_check_branch
      %58 = sbr.rel (0) target = $region29
    $region28: #{tpu_custom_call.1} parent=1 // pred_region
      %59 = dma.done [#allocation5], 1024
    $region29: #{tpu_custom_call.1} parent=1 // pred_fallthru
      _
    // Predicated region
    $region30: #{tpu_custom_call.1} parent=1 // pred_check
      _
    $region31: #{tpu_custom_call.1} parent=1 // pred_check_branch
      %61 = sbr.rel (0) target = $region33
    $region32: #{tpu_custom_call.1} parent=1 // pred_region
      %62 = dma.done [#allocation8], 128
    $region33: #{tpu_custom_call.1} parent=1 // pred_fallthru
      _
    // Predicated region
    $region34: #{tpu_custom_call.1} parent=1 // pred_check
      _
    $region35: #{tpu_custom_call.1} parent=1 // pred_check_branch
      %64 = sbr.rel (0) target = $region37
    $region36: #{tpu_custom_call.1} parent=1 // pred_region
      %65 = dma.done [#allocation8], 256
    $region37: #{tpu_custom_call.1} parent=1 // pred_fallthru
      _
    %v67 = vld [vmem:[#allocation4] sm:$0xf]
    %v68 = vld [vmem:[#allocation4 + $0x4] sm:$0xf]
    %v69 = vld [vmem:[#allocation4 + $0x8] sm:$0xf]
    %v70 = vld [vmem:[#allocation4 + $0xc] sm:$0xf]
    %v71 = vld [vmem:[#allocation4 + $0x10] sm:$0xf]
    %v72 = vld [vmem:[#allocation4 + $0x14] sm:$0xf]
    %v73 = vld [vmem:[#allocation4 + $0x18] sm:$0xf]
    %v74 = vld [vmem:[#allocation4 + $0x1c] sm:$0xf]
    %v75 = vld [vmem:[#allocation4 + $0x20] sm:$0xf]
    %v76 = vld [vmem:[#allocation4 + $0x24] sm:$0xf]
    %v77 = vld [vmem:[#allocation4 + $0x28] sm:$0xf]
    %v78 = vld [vmem:[#allocation4 + $0x2c] sm:$0xf]
    %v79 = vld [vmem:[#allocation4 + $0x30] sm:$0xf]
    %v80 = vld [vmem:[#allocation4 + $0x34] sm:$0xf]
    %v81 = vld [vmem:[#allocation4 + $0x38] sm:$0xf]
    %v82 = vld [vmem:[#allocation4 + $0x3c] sm:$0xf]
    %v83 = vld [vmem:[#allocation7] sm:$0xf]
    %v84 = vld [vmem:[#allocation7 + $0x4] sm:$0xf]
    %v101 = vunpack.c.l.b16 %v67
    %v102 = vunpack.c.l.b16 %v68
    %v103 = vunpack.c.l.b16 %v69
    %v104 = vunpack.c.l.b16 %v70
    %v105 = vunpack.c.l.b16 %v71
    %v106 = vunpack.c.l.b16 %v72
    %v107 = vunpack.c.l.b16 %v73
    %v108 = vunpack.c.l.b16 %v74
    %v109 = vunpack.c.l.b16 %v75
    %v110 = vunpack.c.l.b16 %v76
    %v111 = vunpack.c.l.b16 %v77
    %v112 = vunpack.c.l.b16 %v78
    %v113 = vunpack.c.l.b16 %v79
    %v114 = vunpack.c.l.b16 %v80
    %v115 = vunpack.c.l.b16 %v81
    %v116 = vunpack.c.l.b16 %v82
    %v117 = vpack.c.b16 %v102, %v101
    %v118 = vpack.c.b16 %v104, %v103
    %v119 = vpack.c.b16 %v106, %v105
    %v120 = vpack.c.b16 %v108, %v107
    %v121 = vpack.c.b16 %v110, %v109
    %v122 = vpack.c.b16 %v112, %v111
    %v123 = vpack.c.b16 %v114, %v113
    %v124 = vpack.c.b16 %v116, %v115
    %v127 = vunpack.c.l.b16 %v83
    %v128 = vunpack.c.l.b16 %v84
    %v129 = vpack.c.b16 %v128, %v127
    %vm131 = vcmask 130048
    %v133 = vsel %vm131, %v117, 0
    %v136 = vsel %vm131, %v118, 0
    %v139 = vsel %vm131, %v119, 0
    %v142 = vsel %vm131, %v120, 0
    %v145 = vsel %vm131, %v121, 0
    %v148 = vsel %vm131, %v122, 0
    %v151 = vsel %vm131, %v123, 0
    %v154 = vsel %vm131, %v124, 0
    %156 = vmatprep.subr.bf16.mxu0 0
    %157 = vmatpush1.bf16.msra.mxu0 0
    %158 = vmatprep.subr.bf16.mxu0 0
    %159 = vmatpush1.bf16.msra.mxu0 0
    %160 = vmatprep.subr.bf16.mxu0 0
    %161 = vmatpush1.bf16.msra.mxu0 0
    %162 = vmatprep.subr.bf16.mxu0 0
    %163 = vmatpush1.bf16.msra.mxu0 0
    %164 = vmatprep.subr.bf16.mxu0 0
    %165 = vmatpush1.bf16.msra.mxu0 0
    %166 = vmatprep.subr.bf16.mxu0 0
    %167 = vmatpush1.bf16.msra.mxu0 0
    %168 = vmatprep.subr.bf16.mxu0 0
    %169 = vmatpush1.bf16.msra.mxu0 0
    %170 = vmatprep.subr.bf16.mxu0 0
    %171 = vmatpush1.bf16.msra.mxu0 %v129
    %172 = vmatprep.subr.bf16.mxu0 0
    %173 = vmatpush2.bf16.msra.mxu0 0
    %174 = vmatprep.subr.bf16.mxu0 0
    %175 = vmatpush2.bf16.msra.mxu0 0
    %176 = vmatprep.subr.bf16.mxu0 0
    %177 = vmatpush2.bf16.msra.mxu0 0
    %178 = vmatprep.subr.bf16.mxu0 0
    %179 = vmatpush2.bf16.msra.mxu0 0
    %180 = vmatprep.subr.bf16.mxu0 0
    %181 = vmatpush2.bf16.msra.mxu0 0
    %182 = vmatprep.subr.bf16.mxu0 0
    %183 = vmatpush2.bf16.msra.mxu0 0
    %184 = vmatprep.subr.bf16.mxu0 0
    %185 = vmatpush2.bf16.msra.mxu0 0
    %186 = vmatprep.subr.bf16.mxu0 0
    %187 = vmatpush2.bf16.msra.mxu0 0
    %188 = vmatprep.mubr.bf16.mxu0 0
    %189 = vmatmul.mubr.bf16.gmra.mxu0 %v133
    %v190 = vpop.f32.mrf.mxu0
    %v191 = vadd.f32 0.0, %v190
    %v192 = vpop.f32.mrf.mxu0
    %v193 = vpop.f32.mrf.mxu0
    %v194 = vadd.f32 0.0, %v193
    %v195 = vpop.f32.mrf.mxu0
    %196 = vmatprep.mubr.bf16.mxu0 0
    %197 = vmatmul.mubr.bf16.gmra.mxu0 %v136
    %v198 = vpop.f32.mrf.mxu0
    %v199 = vadd.f32 0.0, %v198
    %v200 = vpop.f32.mrf.mxu0
    %v201 = vpop.f32.mrf.mxu0
    %v202 = vadd.f32 0.0, %v201
    %v203 = vpop.f32.mrf.mxu0
    %204 = vmatprep.mubr.bf16.mxu0 0
    %205 = vmatmul.mubr.bf16.gmra.mxu0 %v139
    %v206 = vpop.f32.mrf.mxu0
    %v207 = vadd.f32 0.0, %v206
    %v208 = vpop.f32.mrf.mxu0
    %v209 = vpop.f32.mrf.mxu0
    %v210 = vadd.f32 0.0, %v209
    %v211 = vpop.f32.mrf.mxu0
    %212 = vmatprep.mubr.bf16.mxu0 0
    %213 = vmatmul.mubr.bf16.gmra.mxu0 %v142
    %v214 = vpop.f32.mrf.mxu0
    %v215 = vadd.f32 0.0, %v214
    %v216 = vpop.f32.mrf.mxu0
    %v217 = vpop.f32.mrf.mxu0
    %v218 = vadd.f32 0.0, %v217
    %v219 = vpop.f32.mrf.mxu0
    %220 = vmatprep.mubr.bf16.mxu0 0
    %221 = vmatmul.mubr.bf16.gmra.mxu0 %v145
    %v222 = vpop.f32.mrf.mxu0
    %v223 = vadd.f32 0.0, %v222
    %v224 = vpop.f32.mrf.mxu0
    %v225 = vpop.f32.mrf.mxu0
    %v226 = vadd.f32 0.0, %v225
    %v227 = vpop.f32.mrf.mxu0
    %228 = vmatprep.mubr.bf16.mxu0 0
    %229 = vmatmul.mubr.bf16.gmra.mxu0 %v148
    %v230 = vpop.f32.mrf.mxu0
    %v231 = vadd.f32 0.0, %v230
    %v232 = vpop.f32.mrf.mxu0
    %v233 = vpop.f32.mrf.mxu0
    %v234 = vadd.f32 0.0, %v233
    %v235 = vpop.f32.mrf.mxu0
    %236 = vmatprep.mubr.bf16.mxu0 0
    %237 = vmatmul.mubr.bf16.gmra.mxu0 %v151
    %v238 = vpop.f32.mrf.mxu0
    %v239 = vadd.f32 0.0, %v238
    %v240 = vpop.f32.mrf.mxu0
    %v241 = vpop.f32.mrf.mxu0
    %v242 = vadd.f32 0.0, %v241
    %v243 = vpop.f32.mrf.mxu0
    %244 = vmatprep.mubr.bf16.mxu0 0
    %245 = vmatmul.mubr.bf16.gmra.mxu0 %v154
    %v246 = vpop.f32.mrf.mxu0
    %v247 = vadd.f32 0.0, %v246
    %v248 = vpop.f32.mrf.mxu0
    %v249 = vpop.f32.mrf.mxu0
    %v250 = vadd.f32 0.0, %v249
    %v251 = vpop.f32.mrf.mxu0
    %252 = vdwg.mxu0
    %v253 = vld [vmem:[%s2] sm:$0x1]
    %v255 = vlaneseq
    %v256 = vshrl.u32 %v255, 7
    %v257 = vsub.s32 0, %v256
    %v258 = vrot.slane %v253, %v257
    %v260 = vadd.f32 %v191, %v258
    %v261 = vadd.f32 %v194, %v258
    %v262 = vadd.f32 %v199, %v258
    %v263 = vadd.f32 %v202, %v258
    %v264 = vadd.f32 %v207, %v258
    %v265 = vadd.f32 %v210, %v258
    %v266 = vadd.f32 %v215, %v258
    %v267 = vadd.f32 %v218, %v258
    %v268 = vadd.f32 %v223, %v258
    %v269 = vadd.f32 %v226, %v258
    %v270 = vadd.f32 %v231, %v258
    %v271 = vadd.f32 %v234, %v258
    %v272 = vadd.f32 %v239, %v258
    %v273 = vadd.f32 %v242, %v258
    %v274 = vadd.f32 %v247, %v258
    %v275 = vadd.f32 %v250, %v258
    %276 = vst [vmem:[#allocation2] sm:$0xff] %v260
    %277 = vst [vmem:[#allocation2 + $0x8] sm:$0xff] %v261
    %278 = vst [vmem:[#allocation2 + $0x10] sm:$0xff] %v262
    %279 = vst [vmem:[#allocation2 + $0x18] sm:$0xff] %v263
    %280 = vst [vmem:[#allocation2 + $0x20] sm:$0xff] %v264
    %281 = vst [vmem:[#allocation2 + $0x28] sm:$0xff] %v265
    %282 = vst [vmem:[#allocation2 + $0x30] sm:$0xff] %v266
    %283 = vst [vmem:[#allocation2 + $0x38] sm:$0xff] %v267
    %284 = vst [vmem:[#allocation2 + $0x40] sm:$0xff] %v268
    %285 = vst [vmem:[#allocation2 + $0x48] sm:$0xff] %v269
    %286 = vst [vmem:[#allocation2 + $0x50] sm:$0xff] %v270
    %287 = vst [vmem:[#allocation2 + $0x58] sm:$0xff] %v271
    %288 = vst [vmem:[#allocation2 + $0x60] sm:$0xff] %v272
    %289 = vst [vmem:[#allocation2 + $0x68] sm:$0xff] %v273
    %290 = vst [vmem:[#allocation2 + $0x70] sm:$0xff] %v274
    %291 = vst [vmem:[#allocation2 + $0x78] sm:$0xff] %v275
    %v292 = vld [vmem:[#allocation9] sm:$0xf]
    %v293 = vld [vmem:[#allocation9 + $0x4] sm:$0xf]
    %v294 = vld [vmem:[#allocation9 + $0x8] sm:$0xf]
    %v295 = vld [vmem:[#allocation9 + $0xc] sm:$0xf]
    %v296 = vlaneseq
    %v297 = vand.u32 %v296, 127
    %vm298 = vcmp.ge.s32.totalorder %v297, 64
    %vm299 = vcmp.lt.s32.totalorder %v297, 96
    %vm300 = vmand %vm298, %vm299
    %v301 = vld [vmem:[#allocation2] sm:$0xff]
    %v302 = vld [vmem:[#allocation2 + $0x8] sm:$0xff]
    %v307 = vunpack.c.l.b16 %v292
    %v308 = vunpack.c.l.b16 %v293
    %v309 = vunpack.c.l.b16 %v294
    %v310 = vunpack.c.l.b16 %v295
    %v311 = vpack.c.b16 %v308, %v307
    %v312 = vpack.c.b16 %v310, %v309
    %vm315 = vcmask 261120
    %v317 = vsel %vm315, 0, 0
    %319 = vmatprep.subr.bf16.mxu0 0
    %320 = vmatpush1.bf16.msra.mxu0 0
    %321 = vmatprep.subr.bf16.mxu0 0
    %322 = vmatpush1.bf16.msra.mxu0 0
    %323 = vmatprep.subr.bf16.mxu0 0
    %324 = vmatpush1.bf16.msra.mxu0 0
    %325 = vmatprep.subr.bf16.mxu0 0
    %326 = vmatpush1.bf16.msra.mxu0 0
    %327 = vmatprep.subr.bf16.mxu0 0
    %328 = vmatpush1.bf16.msra.mxu0 0
    %329 = vmatprep.subr.bf16.mxu0 0
    %330 = vmatpush1.bf16.msra.mxu0 0
    %331 = vmatprep.subr.bf16.mxu0 0
    %332 = vmatpush1.bf16.msra.mxu0 %v312
    %333 = vmatprep.subr.bf16.mxu0 0
    %334 = vmatpush1.bf16.msra.mxu0 %v311
    %335 = vmatprep.subr.bf16.mxu0 0
    %336 = vmatpush2.bf16.msra.mxu0 0
    %337 = vmatprep.subr.bf16.mxu0 0
    %338 = vmatpush2.bf16.msra.mxu0 0
    %339 = vmatprep.subr.bf16.mxu0 0
    %340 = vmatpush2.bf16.msra.mxu0 0
    %341 = vmatprep.subr.bf16.mxu0 0
    %342 = vmatpush2.bf16.msra.mxu0 0
    %343 = vmatprep.subr.bf16.mxu0 0
    %344 = vmatpush2.bf16.msra.mxu0 0
    %345 = vmatprep.subr.bf16.mxu0 0
    %346 = vmatpush2.bf16.msra.mxu0 0
    %347 = vmatprep.subr.bf16.mxu0 0
    %348 = vmatpush2.bf16.msra.mxu0 0
    %349 = vmatprep.subr.bf16.mxu0 0
    %350 = vmatpush2.bf16.msra.mxu0 0
    %351 = vmatprep.mubr.bf16.mxu0 0
    %352 = vmatmul.mubr.bf16.gmra.mxu0 %v317
    %v353 = vpop.f32.mrf.mxu0
    %v354 = vadd.f32 0.0, %v353
    %v355 = vpop.f32.mrf.mxu0
    %v356 = vpop.f32.mrf.mxu0
    %v357 = vadd.f32 0.0, %v356
    %v358 = vpop.f32.mrf.mxu0
    %359 = vdwg.mxu0
    %v360 = vadd.f32 %v301, %v354
    %v361 = vadd.f32 %v302, %v357
    %v362 = vtanh.pop %v360
    %v363 = vtanh.pop %v361
    %v364 = vxor.u32 %v360, 2147483648
    %v365 = vxor.u32 %v361, 2147483648
    %v366 = vmul.f32 %v364, 1.442695
    %v367 = vpow.pop %v366
    %v368 = vmul.f32 %v365, 1.442695
    %v369 = vpow.pop %v368
    %v370 = vadd.f32 %v367, 1.0
    %v371 = vadd.f32 %v369, 1.0
    %v372 = vrcp.pop %v370
    %v373 = vmul.f32 1.0, %v372
    %v374 = vrcp.pop %v371
    %v375 = vmul.f32 1.0, %v374
    %v376 = vsel %vm300, 1, 0
    %vm377 = vcmp.eq.s32.totalorder %v376, 1
    %v378 = vsel %vm377, %v362, %v373
    %v379 = vsel %vm377, %v363, %v375
    %v380 = vmul.f32 %v378, 0.0
    %v381 = vmul.f32 %v379, 0.0
    %384 = vrot.lane.b32.xlu0 %v378, 64
    %v385 = vpop.permute.xlu0 %384
    %386 = vrot.lane.b32.xlu0 %v379, 64
    %v387 = vpop.permute.xlu0 %386
    %v390 = vmul.f32 %v378, %v385
    %v391 = vmul.f32 %v379, %v387
    %394 = vrot.lane.b32.xlu0 %v390, 32
    %v395 = vpop.permute.xlu0 %394
    %396 = vrot.lane.b32.xlu0 %v391, 32
    %v397 = vpop.permute.xlu0 %396
    %v400 = vadd.f32 %v380, %v395
    %v401 = vadd.f32 %v381, %v397
    %v402 = vtanh.pop %v400
    %v403 = vtanh.pop %v401
    %406 = vrot.lane.b32.xlu0 %v402, 64
    %v407 = vpop.permute.xlu0 %406
    %408 = vrot.lane.b32.xlu0 %v403, 64
    %v409 = vpop.permute.xlu0 %408
    %v412 = vmul.f32 %v378, %v407
    %v413 = vmul.f32 %v379, %v409
    %s414 = scalar_lea.vmem [#allocation2], 16
    %v415 = vld [vmem:[%s414] sm:$0xff]
    %v416 = vld [vmem:[%s414 + $0x8] sm:$0xff]
    %v417 = vpack.c.bf16 %v413, %v412
    %419 = vrot.lane.b32.xlu0 %v417, 32
    %v420 = vpop.permute.xlu0 %419
    %v422 = vsel %vm315, %v420, 0
    %424 = vmatprep.subr.bf16.mxu0 0
    %425 = vmatpush1.bf16.msra.mxu0 0
    %426 = vmatprep.subr.bf16.mxu0 0
    %427 = vmatpush1.bf16.msra.mxu0 0
    %428 = vmatprep.subr.bf16.mxu0 0
    %429 = vmatpush1.bf16.msra.mxu0 0
    %430 = vmatprep.subr.bf16.mxu0 0
    %431 = vmatpush1.bf16.msra.mxu0 0
    %432 = vmatprep.subr.bf16.mxu0 0
    %433 = vmatpush1.bf16.msra.mxu0 0
    %434 = vmatprep.subr.bf16.mxu0 0
    %435 = vmatpush1.bf16.msra.mxu0 0
    %436 = vmatprep.subr.bf16.mxu0 0
    %437 = vmatpush1.bf16.msra.mxu0 %v312
    %438 = vmatprep.subr.bf16.mxu0 0
    %439 = vmatpush1.bf16.msra.mxu0 %v311
    %440 = vmatprep.subr.bf16.mxu0 0
    %441 = vmatpush2.bf16.msra.mxu0 0
    %442 = vmatprep.subr.bf16.mxu0 0
    %443 = vmatpush2.bf16.msra.mxu0 0
    %444 = vmatprep.subr.bf16.mxu0 0
    %445 = vmatpush2.bf16.msra.mxu0 0
    %446 = vmatprep.subr.bf16.mxu0 0
    %447 = vmatpush2.bf16.msra.mxu0 0
    %448 = vmatprep.subr.bf16.mxu0 0
    %449 = vmatpush2.bf16.msra.mxu0 0
    %450 = vmatprep.subr.bf16.mxu0 0
    %451 = vmatpush2.bf16.msra.mxu0 0
    %452 = vmatprep.subr.bf16.mxu0 0
    %453 = vmatpush2.bf16.msra.mxu0 0
    %454 = vmatprep.subr.bf16.mxu0 0
    %455 = vmatpush2.bf16.msra.mxu0 0
    %456 = vmatprep.mubr.bf16.mxu0 0
    %457 = vmatmul.mubr.bf16.gmra.mxu0 %v422
    %v458 = vpop.f32.mrf.mxu0
    %v459 = vadd.f32 0.0, %v458
    %v460 = vpop.f32.mrf.mxu0
    %v461 = vpop.f32.mrf.mxu0
    %v462 = vadd.f32 0.0, %v461
    %v463 = vpop.f32.mrf.mxu0
    %464 = vdwg.mxu0
    %v465 = vadd.f32 %v415, %v459
    %v466 = vadd.f32 %v416, %v462
    %v467 = vtanh.pop %v465
    %v468 = vtanh.pop %v466
    %v469 = vxor.u32 %v465, 2147483648
    %v470 = vxor.u32 %v466, 2147483648
    %v471 = vmul.f32 %v469, 1.442695
    %v472 = vpow.pop %v471
    %v473 = vmul.f32 %v470, 1.442695
    %v474 = vpow.pop %v473
    %v475 = vadd.f32 %v472, 1.0
    %v476 = vadd.f32 %v474, 1.0
    %v477 = vrcp.pop %v475
    %v478 = vmul.f32 1.0, %v477
    %v479 = vrcp.pop %v476
    %v480 = vmul.f32 1.0, %v479
    %v481 = vsel %vm377, %v467, %v478
    %v482 = vsel %vm377, %v468, %v480
    %v483 = vmul.f32 %v481, %v400
    %v484 = vmul.f32 %v482, %v401
    %487 = vrot.lane.b32.xlu0 %v481, 64
    %v488 = vpop.permute.xlu0 %487
    %489 = vrot.lane.b32.xlu0 %v482, 64
    %v490 = vpop.permute.xlu0 %489
    %v493 = vmul.f32 %v481, %v488
    %v494 = vmul.f32 %v482, %v490
    %497 = vrot.lane.b32.xlu0 %v493, 32
    %v498 = vpop.permute.xlu0 %497
    %499 = vrot.lane.b32.xlu0 %v494, 32
    %v500 = vpop.permute.xlu0 %499
    %v503 = vadd.f32 %v483, %v498
    %v504 = vadd.f32 %v484, %v500
    %v505 = vtanh.pop %v503
    %v506 = vtanh.pop %v504
    %509 = vrot.lane.b32.xlu0 %v505, 64
    %v510 = vpop.permute.xlu0 %509
    %511 = vrot.lane.b32.xlu0 %v506, 64
    %v512 = vpop.permute.xlu0 %511
    %v515 = vmul.f32 %v481, %v510
    %v516 = vmul.f32 %v482, %v512
    %s517 = scalar_lea.vmem [#allocation2], 32
    %v518 = vld [vmem:[%s517] sm:$0xff]
    %v519 = vld [vmem:[%s517 + $0x8] sm:$0xff]
    %v520 = vpack.c.bf16 %v516, %v515
    %522 = vrot.lane.b32.xlu0 %v520, 32
    %v523 = vpop.permute.xlu0 %522
    %v525 = vsel %vm315, %v523, 0
    %527 = vmatprep.subr.bf16.mxu0 0
    %528 = vmatpush1.bf16.msra.mxu0 0
    %529 = vmatprep.subr.bf16.mxu0 0
    %530 = vmatpush1.bf16.msra.mxu0 0
    %531 = vmatprep.subr.bf16.mxu0 0
    %532 = vmatpush1.bf16.msra.mxu0 0
    %533 = vmatprep.subr.bf16.mxu0 0
    %534 = vmatpush1.bf16.msra.mxu0 0
    %535 = vmatprep.subr.bf16.mxu0 0
    %536 = vmatpush1.bf16.msra.mxu0 0
    %537 = vmatprep.subr.bf16.mxu0 0
    %538 = vmatpush1.bf16.msra.mxu0 0
    %539 = vmatprep.subr.bf16.mxu0 0
    %540 = vmatpush1.bf16.msra.mxu0 %v312
    %541 = vmatprep.subr.bf16.mxu0 0
    %542 = vmatpush1.bf16.msra.mxu0 %v311
    %543 = vmatprep.subr.bf16.mxu0 0
    %544 = vmatpush2.bf16.msra.mxu0 0
    %545 = vmatprep.subr.bf16.mxu0 0
    %546 = vmatpush2.bf16.msra.mxu0 0
    %547 = vmatprep.subr.bf16.mxu0 0
    %548 = vmatpush2.bf16.msra.mxu0 0
    %549 = vmatprep.subr.bf16.mxu0 0
    %550 = vmatpush2.bf16.msra.mxu0 0
    %551 = vmatprep.subr.bf16.mxu0 0
    %552 = vmatpush2.bf16.msra.mxu0 0
    %553 = vmatprep.subr.bf16.mxu0 0
    %554 = vmatpush2.bf16.msra.mxu0 0
    %555 = vmatprep.subr.bf16.mxu0 0
    %556 = vmatpush2.bf16.msra.mxu0 0
    %557 = vmatprep.subr.bf16.mxu0 0
    %558 = vmatpush2.bf16.msra.mxu0 0
    %559 = vmatprep.mubr.bf16.mxu0 0
    %560 = vmatmul.mubr.bf16.gmra.mxu0 %v525
    %v561 = vpop.f32.mrf.mxu0
    %v562 = vadd.f32 0.0, %v561
    %v563 = vpop.f32.mrf.mxu0
    %v564 = vpop.f32.mrf.mxu0
    %v565 = vadd.f32 0.0, %v564
    %v566 = vpop.f32.mrf.mxu0
    %567 = vdwg.mxu0
    %v568 = vadd.f32 %v518, %v562
    %v569 = vadd.f32 %v519, %v565
    %v570 = vtanh.pop %v568
    %v571 = vtanh.pop %v569
    %v572 = vxor.u32 %v568, 2147483648
    %v573 = vxor.u32 %v569, 2147483648
    %v574 = vmul.f32 %v572, 1.442695
    %v575 = vpow.pop %v574
    %v576 = vmul.f32 %v573, 1.442695
    %v577 = vpow.pop %v576
    %v578 = vadd.f32 %v575, 1.0
    %v579 = vadd.f32 %v577, 1.0
    %v580 = vrcp.pop %v578
    %v581 = vmul.f32 1.0, %v580
    %v582 = vrcp.pop %v579
    %v583 = vmul.f32 1.0, %v582
    %v584 = vsel %vm377, %v570, %v581
    %v585 = vsel %vm377, %v571, %v583
    %v586 = vmul.f32 %v584, %v503
    %v587 = vmul.f32 %v585, %v504
    %590 = vrot.lane.b32.xlu0 %v584, 64
    %v591 = vpop.permute.xlu0 %590
    %592 = vrot.lane.b32.xlu0 %v585, 64
    %v593 = vpop.permute.xlu0 %592
    %v596 = vmul.f32 %v584, %v591
    %v597 = vmul.f32 %v585, %v593
    %600 = vrot.lane.b32.xlu0 %v596, 32
    %v601 = vpop.permute.xlu0 %600
    %602 = vrot.lane.b32.xlu0 %v597, 32
    %v603 = vpop.permute.xlu0 %602
    %v606 = vadd.f32 %v586, %v601
    %v607 = vadd.f32 %v587, %v603
    %v608 = vtanh.pop %v606
    %v609 = vtanh.pop %v607
    %612 = vrot.lane.b32.xlu0 %v608, 64
    %v613 = vpop.permute.xlu0 %612
    %614 = vrot.lane.b32.xlu0 %v609, 64
    %v615 = vpop.permute.xlu0 %614
    %v618 = vmul.f32 %v584, %v613
    %v619 = vmul.f32 %v585, %v615
    %s620 = scalar_lea.vmem [#allocation2], 48
    %v621 = vld [vmem:[%s620] sm:$0xff]
    %v622 = vld [vmem:[%s620 + $0x8] sm:$0xff]
    %v623 = vpack.c.bf16 %v619, %v618
    %625 = vrot.lane.b32.xlu0 %v623, 32
    %v626 = vpop.permute.xlu0 %625
    %v628 = vsel %vm315, %v626, 0
    %630 = vmatprep.subr.bf16.mxu0 0
    %631 = vmatpush1.bf16.msra.mxu0 0
    %632 = vmatprep.subr.bf16.mxu0 0
    %633 = vmatpush1.bf16.msra.mxu0 0
    %634 = vmatprep.subr.bf16.mxu0 0
    %635 = vmatpush1.bf16.msra.mxu0 0
    %636 = vmatprep.subr.bf16.mxu0 0
    %637 = vmatpush1.bf16.msra.mxu0 0
    %638 = vmatprep.subr.bf16.mxu0 0
    %639 = vmatpush1.bf16.msra.mxu0 0
    %640 = vmatprep.subr.bf16.mxu0 0
    %641 = vmatpush1.bf16.msra.mxu0 0
    %642 = vmatprep.subr.bf16.mxu0 0
    %643 = vmatpush1.bf16.msra.mxu0 %v312
    %644 = vmatprep.subr.bf16.mxu0 0
    %645 = vmatpush1.bf16.msra.mxu0 %v311
    %646 = vmatprep.subr.bf16.mxu0 0
    %647 = vmatpush2.bf16.msra.mxu0 0
    %648 = vmatprep.subr.bf16.mxu0 0
    %649 = vmatpush2.bf16.msra.mxu0 0
    %650 = vmatprep.subr.bf16.mxu0 0
    %651 = vmatpush2.bf16.msra.mxu0 0
    %652 = vmatprep.subr.bf16.mxu0 0
    %653 = vmatpush2.bf16.msra.mxu0 0
    %654 = vmatprep.subr.bf16.mxu0 0
    %655 = vmatpush2.bf16.msra.mxu0 0
    %656 = vmatprep.subr.bf16.mxu0 0
    %657 = vmatpush2.bf16.msra.mxu0 0
    %658 = vmatprep.subr.bf16.mxu0 0
    %659 = vmatpush2.bf16.msra.mxu0 0
    %660 = vmatprep.subr.bf16.mxu0 0
    %661 = vmatpush2.bf16.msra.mxu0 0
    %662 = vmatprep.mubr.bf16.mxu0 0
    %663 = vmatmul.mubr.bf16.gmra.mxu0 %v628
    %v664 = vpop.f32.mrf.mxu0
    %v665 = vadd.f32 0.0, %v664
    %v666 = vpop.f32.mrf.mxu0
    %v667 = vpop.f32.mrf.mxu0
    %v668 = vadd.f32 0.0, %v667
    %v669 = vpop.f32.mrf.mxu0
    %670 = vdwg.mxu0
    %v671 = vadd.f32 %v621, %v665
    %v672 = vadd.f32 %v622, %v668
    %v673 = vtanh.pop %v671
    %v674 = vtanh.pop %v672
    %v675 = vxor.u32 %v671, 2147483648
    %v676 = vxor.u32 %v672, 2147483648
    %v677 = vmul.f32 %v675, 1.442695
    %v678 = vpow.pop %v677
    %v679 = vmul.f32 %v676, 1.442695
    %v680 = vpow.pop %v679
    %v681 = vadd.f32 %v678, 1.0
    %v682 = vadd.f32 %v680, 1.0
    %v683 = vrcp.pop %v681
    %v684 = vmul.f32 1.0, %v683
    %v685 = vrcp.pop %v682
    %v686 = vmul.f32 1.0, %v685
    %v687 = vsel %vm377, %v673, %v684
    %v688 = vsel %vm377, %v674, %v686
    %v689 = vmul.f32 %v687, %v606
    %v690 = vmul.f32 %v688, %v607
    %693 = vrot.lane.b32.xlu0 %v687, 64
    %v694 = vpop.permute.xlu0 %693
    %695 = vrot.lane.b32.xlu0 %v688, 64
    %v696 = vpop.permute.xlu0 %695
    %v699 = vmul.f32 %v687, %v694
    %v700 = vmul.f32 %v688, %v696
    %703 = vrot.lane.b32.xlu0 %v699, 32
    %v704 = vpop.permute.xlu0 %703
    %705 = vrot.lane.b32.xlu0 %v700, 32
    %v706 = vpop.permute.xlu0 %705
    %v709 = vadd.f32 %v689, %v704
    %v710 = vadd.f32 %v690, %v706
    %v711 = vtanh.pop %v709
    %v712 = vtanh.pop %v710
    %715 = vrot.lane.b32.xlu0 %v711, 64
    %v716 = vpop.permute.xlu0 %715
    %717 = vrot.lane.b32.xlu0 %v712, 64
    %v718 = vpop.permute.xlu0 %717
    %v721 = vmul.f32 %v687, %v716
    %v722 = vmul.f32 %v688, %v718
    %s723 = scalar_lea.vmem [#allocation2], 64
    %v724 = vld [vmem:[%s723] sm:$0xff]
    %v725 = vld [vmem:[%s723 + $0x8] sm:$0xff]
    %v726 = vpack.c.bf16 %v722, %v721
    %728 = vrot.lane.b32.xlu0 %v726, 32
    %v729 = vpop.permute.xlu0 %728
    %v731 = vsel %vm315, %v729, 0
    %733 = vmatprep.subr.bf16.mxu0 0
    %734 = vmatpush1.bf16.msra.mxu0 0
    %735 = vmatprep.subr.bf16.mxu0 0
    %736 = vmatpush1.bf16.msra.mxu0 0
    %737 = vmatprep.subr.bf16.mxu0 0
    %738 = vmatpush1.bf16.msra.mxu0 0
    %739 = vmatprep.subr.bf16.mxu0 0
    %740 = vmatpush1.bf16.msra.mxu0 0
    %741 = vmatprep.subr.bf16.mxu0 0
    %742 = vmatpush1.bf16.msra.mxu0 0
    %743 = vmatprep.subr.bf16.mxu0 0
    %744 = vmatpush1.bf16.msra.mxu0 0
    %745 = vmatprep.subr.bf16.mxu0 0
    %746 = vmatpush1.bf16.msra.mxu0 %v312
    %747 = vmatprep.subr.bf16.mxu0 0
    %748 = vmatpush1.bf16.msra.mxu0 %v311
    %749 = vmatprep.subr.bf16.mxu0 0
    %750 = vmatpush2.bf16.msra.mxu0 0
    %751 = vmatprep.subr.bf16.mxu0 0
    %752 = vmatpush2.bf16.msra.mxu0 0
    %753 = vmatprep.subr.bf16.mxu0 0
    %754 = vmatpush2.bf16.msra.mxu0 0
    %755 = vmatprep.subr.bf16.mxu0 0
    %756 = vmatpush2.bf16.msra.mxu0 0
    %757 = vmatprep.subr.bf16.mxu0 0
    %758 = vmatpush2.bf16.msra.mxu0 0
    %759 = vmatprep.subr.bf16.mxu0 0
    %760 = vmatpush2.bf16.msra.mxu0 0
    %761 = vmatprep.subr.bf16.mxu0 0
    %762 = vmatpush2.bf16.msra.mxu0 0
    %763 = vmatprep.subr.bf16.mxu0 0
    %764 = vmatpush2.bf16.msra.mxu0 0
    %765 = vmatprep.mubr.bf16.mxu0 0
    %766 = vmatmul.mubr.bf16.gmra.mxu0 %v731
    %v767 = vpop.f32.mrf.mxu0
    %v768 = vadd.f32 0.0, %v767
    %v769 = vpop.f32.mrf.mxu0
    %v770 = vpop.f32.mrf.mxu0
    %v771 = vadd.f32 0.0, %v770
    %v772 = vpop.f32.mrf.mxu0
    %773 = vdwg.mxu0
    %v774 = vadd.f32 %v724, %v768
    %v775 = vadd.f32 %v725, %v771
    %v776 = vtanh.pop %v774
    %v777 = vtanh.pop %v775
    %v778 = vxor.u32 %v774, 2147483648
    %v779 = vxor.u32 %v775, 2147483648
    %v780 = vmul.f32 %v778, 1.442695
    %v781 = vpow.pop %v780
    %v782 = vmul.f32 %v779, 1.442695
    %v783 = vpow.pop %v782
    %v784 = vadd.f32 %v781, 1.0
    %v785 = vadd.f32 %v783, 1.0
    %v786 = vrcp.pop %v784
    %v787 = vmul.f32 1.0, %v786
    %v788 = vrcp.pop %v785
    %v789 = vmul.f32 1.0, %v788
    %v790 = vsel %vm377, %v776, %v787
    %v791 = vsel %vm377, %v777, %v789
    %v792 = vmul.f32 %v790, %v709
    %v793 = vmul.f32 %v791, %v710
    %796 = vrot.lane.b32.xlu0 %v790, 64
    %v797 = vpop.permute.xlu0 %796
    %798 = vrot.lane.b32.xlu0 %v791, 64
    %v799 = vpop.permute.xlu0 %798
    %v802 = vmul.f32 %v790, %v797
    %v803 = vmul.f32 %v791, %v799
    %806 = vrot.lane.b32.xlu0 %v802, 32
    %v807 = vpop.permute.xlu0 %806
    %808 = vrot.lane.b32.xlu0 %v803, 32
    %v809 = vpop.permute.xlu0 %808
    %v812 = vadd.f32 %v792, %v807
    %v813 = vadd.f32 %v793, %v809
    %v814 = vtanh.pop %v812
    %v815 = vtanh.pop %v813
    %818 = vrot.lane.b32.xlu0 %v814, 64
    %v819 = vpop.permute.xlu0 %818
    %820 = vrot.lane.b32.xlu0 %v815, 64
    %v821 = vpop.permute.xlu0 %820
    %v824 = vmul.f32 %v790, %v819
    %v825 = vmul.f32 %v791, %v821
    %s826 = scalar_lea.vmem [#allocation2], 80
    %v827 = vld [vmem:[%s826] sm:$0xff]
    %v828 = vld [vmem:[%s826 + $0x8] sm:$0xff]
    %v829 = vpack.c.bf16 %v825, %v824
    %831 = vrot.lane.b32.xlu0 %v829, 32
    %v832 = vpop.permute.xlu0 %831
    %v834 = vsel %vm315, %v832, 0
    %836 = vmatprep.subr.bf16.mxu0 0
    %837 = vmatpush1.bf16.msra.mxu0 0
    %838 = vmatprep.subr.bf16.mxu0 0
    %839 = vmatpush1.bf16.msra.mxu0 0
    %840 = vmatprep.subr.bf16.mxu0 0
    %841 = vmatpush1.bf16.msra.mxu0 0
    %842 = vmatprep.subr.bf16.mxu0 0
    %843 = vmatpush1.bf16.msra.mxu0 0
    %844 = vmatprep.subr.bf16.mxu0 0
    %845 = vmatpush1.bf16.msra.mxu0 0
    %846 = vmatprep.subr.bf16.mxu0 0
    %847 = vmatpush1.bf16.msra.mxu0 0
    %848 = vmatprep.subr.bf16.mxu0 0
    %849 = vmatpush1.bf16.msra.mxu0 %v312
    %850 = vmatprep.subr.bf16.mxu0 0
    %851 = vmatpush1.bf16.msra.mxu0 %v311
    %852 = vmatprep.subr.bf16.mxu0 0
    %853 = vmatpush2.bf16.msra.mxu0 0
    %854 = vmatprep.subr.bf16.mxu0 0
    %855 = vmatpush2.bf16.msra.mxu0 0
    %856 = vmatprep.subr.bf16.mxu0 0
    %857 = vmatpush2.bf16.msra.mxu0 0
    %858 = vmatprep.subr.bf16.mxu0 0
    %859 = vmatpush2.bf16.msra.mxu0 0
    %860 = vmatprep.subr.bf16.mxu0 0
    %861 = vmatpush2.bf16.msra.mxu0 0
    %862 = vmatprep.subr.bf16.mxu0 0
    %863 = vmatpush2.bf16.msra.mxu0 0
    %864 = vmatprep.subr.bf16.mxu0 0
    %865 = vmatpush2.bf16.msra.mxu0 0
    %866 = vmatprep.subr.bf16.mxu0 0
    %867 = vmatpush2.bf16.msra.mxu0 0
    %868 = vmatprep.mubr.bf16.mxu0 0
    %869 = vmatmul.mubr.bf16.gmra.mxu0 %v834
    %v870 = vpop.f32.mrf.mxu0
    %v871 = vadd.f32 0.0, %v870
    %v872 = vpop.f32.mrf.mxu0
    %v873 = vpop.f32.mrf.mxu0
    %v874 = vadd.f32 0.0, %v873
    %v875 = vpop.f32.mrf.mxu0
    %876 = vdwg.mxu0
    %v877 = vadd.f32 %v827, %v871
    %v878 = vadd.f32 %v828, %v874
    %v879 = vtanh.pop %v877
    %v880 = vtanh.pop %v878
    %v881 = vxor.u32 %v877, 2147483648
    %v882 = vxor.u32 %v878, 2147483648
    %v883 = vmul.f32 %v881, 1.442695
    %v884 = vpow.pop %v883
    %v885 = vmul.f32 %v882, 1.442695
    %v886 = vpow.pop %v885
    %v887 = vadd.f32 %v884, 1.0
    %v888 = vadd.f32 %v886, 1.0
    %v889 = vrcp.pop %v887
    %v890 = vmul.f32 1.0, %v889
    %v891 = vrcp.pop %v888
    %v892 = vmul.f32 1.0, %v891
    %v893 = vsel %vm377, %v879, %v890
    %v894 = vsel %vm377, %v880, %v892
    %v895 = vmul.f32 %v893, %v812
    %v896 = vmul.f32 %v894, %v813
    %899 = vrot.lane.b32.xlu0 %v893, 64
    %v900 = vpop.permute.xlu0 %899
    %901 = vrot.lane.b32.xlu0 %v894, 64
    %v902 = vpop.permute.xlu0 %901
    %v905 = vmul.f32 %v893, %v900
    %v906 = vmul.f32 %v894, %v902
    %909 = vrot.lane.b32.xlu0 %v905, 32
    %v910 = vpop.permute.xlu0 %909
    %911 = vrot.lane.b32.xlu0 %v906, 32
    %v912 = vpop.permute.xlu0 %911
    %v915 = vadd.f32 %v895, %v910
    %v916 = vadd.f32 %v896, %v912
    %v917 = vtanh.pop %v915
    %v918 = vtanh.pop %v916
    %921 = vrot.lane.b32.xlu0 %v917, 64
    %v922 = vpop.permute.xlu0 %921
    %923 = vrot.lane.b32.xlu0 %v918, 64
    %v924 = vpop.permute.xlu0 %923
    %v927 = vmul.f32 %v893, %v922
    %v928 = vmul.f32 %v894, %v924
    %s929 = scalar_lea.vmem [#allocation2], 96
    %v930 = vld [vmem:[%s929] sm:$0xff]
    %v931 = vld [vmem:[%s929 + $0x8] sm:$0xff]
    %v932 = vpack.c.bf16 %v928, %v927
    %934 = vrot.lane.b32.xlu0 %v932, 32
    %v935 = vpop.permute.xlu0 %934
    %v937 = vsel %vm315, %v935, 0
    %939 = vmatprep.subr.bf16.mxu0 0
    %940 = vmatpush1.bf16.msra.mxu0 0
    %941 = vmatprep.subr.bf16.mxu0 0
    %942 = vmatpush1.bf16.msra.mxu0 0
    %943 = vmatprep.subr.bf16.mxu0 0
    %944 = vmatpush1.bf16.msra.mxu0 0
    %945 = vmatprep.subr.bf16.mxu0 0
    %946 = vmatpush1.bf16.msra.mxu0 0
    %947 = vmatprep.subr.bf16.mxu0 0
    %948 = vmatpush1.bf16.msra.mxu0 0
    %949 = vmatprep.subr.bf16.mxu0 0
    %950 = vmatpush1.bf16.msra.mxu0 0
    %951 = vmatprep.subr.bf16.mxu0 0
    %952 = vmatpush1.bf16.msra.mxu0 %v312
    %953 = vmatprep.subr.bf16.mxu0 0
    %954 = vmatpush1.bf16.msra.mxu0 %v311
    %955 = vmatprep.subr.bf16.mxu0 0
    %956 = vmatpush2.bf16.msra.mxu0 0
    %957 = vmatprep.subr.bf16.mxu0 0
    %958 = vmatpush2.bf16.msra.mxu0 0
    %959 = vmatprep.subr.bf16.mxu0 0
    %960 = vmatpush2.bf16.msra.mxu0 0
    %961 = vmatprep.subr.bf16.mxu0 0
    %962 = vmatpush2.bf16.msra.mxu0 0
    %963 = vmatprep.subr.bf16.mxu0 0
    %964 = vmatpush2.bf16.msra.mxu0 0
    %965 = vmatprep.subr.bf16.mxu0 0
    %966 = vmatpush2.bf16.msra.mxu0 0
    %967 = vmatprep.subr.bf16.mxu0 0
    %968 = vmatpush2.bf16.msra.mxu0 0
    %969 = vmatprep.subr.bf16.mxu0 0
    %970 = vmatpush2.bf16.msra.mxu0 0
    %971 = vmatprep.mubr.bf16.mxu0 0
    %972 = vmatmul.mubr.bf16.gmra.mxu0 %v937
    %v973 = vpop.f32.mrf.mxu0
    %v974 = vadd.f32 0.0, %v973
    %v975 = vpop.f32.mrf.mxu0
    %v976 = vpop.f32.mrf.mxu0
    %v977 = vadd.f32 0.0, %v976
    %v978 = vpop.f32.mrf.mxu0
    %979 = vdwg.mxu0
    %v980 = vadd.f32 %v930, %v974
    %v981 = vadd.f32 %v931, %v977
    %v982 = vtanh.pop %v980
    %v983 = vtanh.pop %v981
    %v984 = vxor.u32 %v980, 2147483648
    %v985 = vxor.u32 %v981, 2147483648
    %v986 = vmul.f32 %v984, 1.442695
    %v987 = vpow.pop %v986
    %v988 = vmul.f32 %v985, 1.442695
    %v989 = vpow.pop %v988
    %v990 = vadd.f32 %v987, 1.0
    %v991 = vadd.f32 %v989, 1.0
    %v992 = vrcp.pop %v990
    %v993 = vmul.f32 1.0, %v992
    %v994 = vrcp.pop %v991
    %v995 = vmul.f32 1.0, %v994
    %v996 = vsel %vm377, %v982, %v993
    %v997 = vsel %vm377, %v983, %v995
    %v998 = vmul.f32 %v996, %v915
    %v999 = vmul.f32 %v997, %v916
    %1002 = vrot.lane.b32.xlu0 %v996, 64
    %v1003 = vpop.permute.xlu0 %1002
    %1004 = vrot.lane.b32.xlu0 %v997, 64
    %v1005 = vpop.permute.xlu0 %1004
    %v1008 = vmul.f32 %v996, %v1003
    %v1009 = vmul.f32 %v997, %v1005
    %1012 = vrot.lane.b32.xlu0 %v1008, 32
    %v1013 = vpop.permute.xlu0 %1012
    %1014 = vrot.lane.b32.xlu0 %v1009, 32
    %v1015 = vpop.permute.xlu0 %1014
    %v1018 = vadd.f32 %v998, %v1013
    %v1019 = vadd.f32 %v999, %v1015
    %v1020 = vtanh.pop %v1018
    %v1021 = vtanh.pop %v1019
    %1024 = vrot.lane.b32.xlu0 %v1020, 64
    %v1025 = vpop.permute.xlu0 %1024
    %1026 = vrot.lane.b32.xlu0 %v1021, 64
    %v1027 = vpop.permute.xlu0 %1026
    %v1030 = vmul.f32 %v996, %v1025
    %v1031 = vmul.f32 %v997, %v1027
    %s1032 = scalar_lea.vmem [#allocation2], 112
    %v1033 = vld [vmem:[%s1032] sm:$0xff]
    %v1034 = vld [vmem:[%s1032 + $0x8] sm:$0xff]
    %v1035 = vpack.c.bf16 %v1031, %v1030
    %1037 = vrot.lane.b32.xlu0 %v1035, 32
    %v1038 = vpop.permute.xlu0 %1037
    %v1040 = vsel %vm315, %v1038, 0
    %1042 = vmatprep.subr.bf16.mxu0 0
    %1043 = vmatpush1.bf16.msra.mxu0 0
    %1044 = vmatprep.subr.bf16.mxu0 0
    %1045 = vmatpush1.bf16.msra.mxu0 0
    %1046 = vmatprep.subr.bf16.mxu0 0
    %1047 = vmatpush1.bf16.msra.mxu0 0
    %1048 = vmatprep.subr.bf16.mxu0 0
    %1049 = vmatpush1.bf16.msra.mxu0 0
    %1050 = vmatprep.subr.bf16.mxu0 0
    %1051 = vmatpush1.bf16.msra.mxu0 0
    %1052 = vmatprep.subr.bf16.mxu0 0
    %1053 = vmatpush1.bf16.msra.mxu0 0
    %1054 = vmatprep.subr.bf16.mxu0 0
    %1055 = vmatpush1.bf16.msra.mxu0 %v312
    %1056 = vmatprep.subr.bf16.mxu0 0
    %1057 = vmatpush1.bf16.msra.mxu0 %v311
    %1058 = vmatprep.subr.bf16.mxu0 0
    %1059 = vmatpush2.bf16.msra.mxu0 0
    %1060 = vmatprep.subr.bf16.mxu0 0
    %1061 = vmatpush2.bf16.msra.mxu0 0
    %1062 = vmatprep.subr.bf16.mxu0 0
    %1063 = vmatpush2.bf16.msra.mxu0 0
    %1064 = vmatprep.subr.bf16.mxu0 0
    %1065 = vmatpush2.bf16.msra.mxu0 0
    %1066 = vmatprep.subr.bf16.mxu0 0
    %1067 = vmatpush2.bf16.msra.mxu0 0
    %1068 = vmatprep.subr.bf16.mxu0 0
    %1069 = vmatpush2.bf16.msra.mxu0 0
    %1070 = vmatprep.subr.bf16.mxu0 0
    %1071 = vmatpush2.bf16.msra.mxu0 0
    %1072 = vmatprep.subr.bf16.mxu0 0
    %1073 = vmatpush2.bf16.msra.mxu0 0
    %1074 = vmatprep.mubr.bf16.mxu0 0
    %1075 = vmatmul.mubr.bf16.gmra.mxu0 %v1040
    %v1076 = vpop.f32.mrf.mxu0
    %v1077 = vadd.f32 0.0, %v1076
    %v1078 = vpop.f32.mrf.mxu0
    %v1079 = vpop.f32.mrf.mxu0
    %v1080 = vadd.f32 0.0, %v1079
    %v1081 = vpop.f32.mrf.mxu0
    %1082 = vdwg.mxu0
    %v1083 = vadd.f32 %v1033, %v1077
    %v1084 = vadd.f32 %v1034, %v1080
    %v1085 = vtanh.pop %v1083
    %v1086 = vtanh.pop %v1084
    %v1087 = vxor.u32 %v1083, 2147483648
    %v1088 = vxor.u32 %v1084, 2147483648
    %v1089 = vmul.f32 %v1087, 1.442695
    %v1090 = vpow.pop %v1089
    %v1091 = vmul.f32 %v1088, 1.442695
    %v1092 = vpow.pop %v1091
    %v1093 = vadd.f32 %v1090, 1.0
    %v1094 = vadd.f32 %v1092, 1.0
    %v1095 = vrcp.pop %v1093
    %v1096 = vmul.f32 1.0, %v1095
    %v1097 = vrcp.pop %v1094
    %v1098 = vmul.f32 1.0, %v1097
    %v1099 = vsel %vm377, %v1085, %v1096
    %v1100 = vsel %vm377, %v1086, %v1098
    %v1101 = vmul.f32 %v1099, %v1018
    %v1102 = vmul.f32 %v1100, %v1019
    %1105 = vrot.lane.b32.xlu0 %v1099, 64
    %v1106 = vpop.permute.xlu0 %1105
    %1107 = vrot.lane.b32.xlu0 %v1100, 64
    %v1108 = vpop.permute.xlu0 %1107
    %v1111 = vmul.f32 %v1099, %v1106
    %v1112 = vmul.f32 %v1100, %v1108
    %1115 = vrot.lane.b32.xlu0 %v1111, 32
    %v1116 = vpop.permute.xlu0 %1115
    %1117 = vrot.lane.b32.xlu0 %v1112, 32
    %v1118 = vpop.permute.xlu0 %1117
    %v1121 = vadd.f32 %v1101, %v1116
    %v1122 = vadd.f32 %v1102, %v1118
    %v1123 = vtanh.pop %v1121
    %v1124 = vtanh.pop %v1122
    %1127 = vrot.lane.b32.xlu0 %v1123, 64
    %v1128 = vpop.permute.xlu0 %1127
    %1129 = vrot.lane.b32.xlu0 %v1124, 64
    %v1130 = vpop.permute.xlu0 %1129
    %v1133 = vmul.f32 %v1099, %v1128
    %v1134 = vmul.f32 %v1100, %v1130
    %v1135 = vld [vmem:[%s4] sm:$0x1]
    %v1136 = vpack.c.bf16 %v1134, %v1133
    %s1137 = sld [smem:[#allocation3]]
    %v1138 = vstv %s1137
    %1140 = vrot.lane.b32.xlu0 %v1136, 32
    %v1141 = vpop.permute.xlu0 %1140
    %v1143 = vsel %vm315, %v1135, 0
    %v1146 = vsel %vm315, %v1141, 0
    %1148 = vmatprep.subr.bf16.mxu0 0
    %1149 = vmatpush1.bf16.xpose.msra.mxu0 0
    %1150 = vmatprep.subr.bf16.mxu0 0
    %1151 = vmatpush1.bf16.xpose.msra.mxu0 0
    %1152 = vmatprep.subr.bf16.mxu0 0
    %1153 = vmatpush1.bf16.xpose.msra.mxu0 0
    %1154 = vmatprep.subr.bf16.mxu0 0
    %1155 = vmatpush1.bf16.xpose.msra.mxu0 0
    %1156 = vmatprep.subr.bf16.mxu0 0
    %1157 = vmatpush1.bf16.xpose.msra.mxu0 0
    %1158 = vmatprep.subr.bf16.mxu0 0
    %1159 = vmatpush1.bf16.xpose.msra.mxu0 0
    %1160 = vmatprep.subr.bf16.mxu0 0
    %1161 = vmatpush1.bf16.xpose.msra.mxu0 0
    %1162 = vmatprep.subr.bf16.mxu0 0
    %1163 = vmatpush1.bf16.xpose.msra.mxu0 %v1146
    %1164 = vmatprep.subr.bf16.mxu0 0
    %1165 = vmatpush2.bf16.xpose.msra.mxu0 0
    %1166 = vmatprep.subr.bf16.mxu0 0
    %1167 = vmatpush2.bf16.xpose.msra.mxu0 0
    %1168 = vmatprep.subr.bf16.mxu0 0
    %1169 = vmatpush2.bf16.xpose.msra.mxu0 0
    %1170 = vmatprep.subr.bf16.mxu0 0
    %1171 = vmatpush2.bf16.xpose.msra.mxu0 0
    %1172 = vmatprep.subr.bf16.mxu0 0
    %1173 = vmatpush2.bf16.xpose.msra.mxu0 0
    %1174 = vmatprep.subr.bf16.mxu0 0
    %1175 = vmatpush2.bf16.xpose.msra.mxu0 0
    %1176 = vmatprep.subr.bf16.mxu0 0
    %1177 = vmatpush2.bf16.xpose.msra.mxu0 0
    %1178 = vmatprep.subr.bf16.mxu0 0
    %1179 = vmatpush2.bf16.xpose.msra.mxu0 0
    %1180 = vmatprep.mubr.bf16.mxu0 0
    %1181 = vmatmul.mubr.bf16.gmra.mxu0 %v1143
    %v1182 = vpop.f32.mrf.mxu0
    %v1183 = vadd.f32 %v1138, %v1182
    %v1184 = vpop.f32.mrf.mxu0
    %v1185 = vpop.f32.mrf.mxu0
    %v1186 = vpop.f32.mrf.mxu0
    %1187 = vdwg.mxu0
    %v1188 = vmax.f32 %v1183, 0.0
    %vm1189 = vcmp.ne.f32.partialorder %v1183, %v1183
    %v1190 = vadd.f32 %v1183, 0.0
    %v1191 = vand.u32 2147483647, %v1183
    %v1192 = vsub.f32 0.0, %v1191
    %v1193 = vmul.f32 %v1192, 1.442695
    %v1194 = vpow.pop %v1193
    %v1195 = vadd.f32 %v1194, 1.0
    %v1196 = vlog2.pop %v1195
    %v1197 = vmul.f32 %v1196, 0.6931472
    %v1198 = vmul.f32 -0.5, %v1194
    %v1199 = vadd.f32 %v1198, 1.0
    %v1200 = vmul.f32 %v1199, %v1194
    %v1201 = vand.u32 2147483647, %v1194
    %vm1202 = vcmp.lt.f32.partialorder %v1201, 0.0004427343
    %v1203 = vsel %vm1202, %v1200, %v1197
    %v1204 = vadd.f32 %v1188, %v1203
    %v1205 = vsel %vm1189, %v1190, %v1204
    %vm1206 = vcmask 122880
    %1207 = vst.msk [vmem:[#allocation10] sm:$0x1] %vm1206, %v1205
    // Predicated region
    $region38: #{tpu_custom_call.1} parent=1 // pred_check
      _
    $region39: #{tpu_custom_call.1} parent=1 // pred_check_branch
      %1209 = sbr.rel (0) target = $region41
    $region40: #{tpu_custom_call.1} parent=1 // pred_region
      %s1211 = ssub.s32 16, 16
      %1212 = vsyncadd [#allocation6], %s1211
      %s1214 = sshll.u32 [#allocation10], 4
      %s1215 = int_to_ptr.vmem [resolvable:$true] %s1214
      %1217 = dma.vmem_to_hbm [thread:$0]  %s1215, 16, %s6, [#allocation6]
    $region41: #{tpu_custom_call.1} parent=1 // pred_fallthru
      _
    // Predicated region
    $region42: #{tpu_custom_call.1} parent=1 // pred_check
      _
    $region43: #{tpu_custom_call.1} parent=1 // pred_check_branch
      %1219 = sbr.rel (0) target = $region45
    $region44: #{tpu_custom_call.1} parent=1 // pred_region
      %1220 = dma.done [#allocation6], 16
    $region45: #{tpu_custom_call.1} parent=1 // pred_fallthru
      _
    %1221 = vsyncpa [#allocation5], 1
    %1222 = vsyncpa [#allocation8], 1
    %1223 = vsyncpa [#allocation6], 1

</llo_original>
